<compile_context>
chip_gen: v6e
topology: v6e:2x2x1
jax: 0.10.0
libtpu: 0.0.40
codegen_flags: <defaults>
</compile_context>

<pallas_src>
import numpy as np
import jax
import jax.numpy as jnp
from jax.experimental import pallas as pl
from jax.experimental.pallas import tpu as pltpu

# ----- "config" (small, deterministic, consistent with Gemma2Config fields) ----
HIDDEN = 256                 # config.hidden_size
NUM_HEADS = 4                # config.num_attention_heads
NUM_KV_HEADS = 2             # config.num_key_value_heads
HEAD_DIM = 128               # config.head_dim
GROUPS = NUM_HEADS // NUM_KV_HEADS
PER_KV = (GROUPS + 2) * HEAD_DIM        # q-group + k + v columns per kv head
K_OFF_G = GROUPS * HEAD_DIM             # k offset inside a per-kv-head block
V_OFF_G = (GROUPS + 1) * HEAD_DIM       # v offset inside a per-kv-head block
SOFTCAP = 50.0               # logit_softcapping used by context_attention_fwd
QUERY_PRE_ATTN_SCALAR = HEAD_DIM        # gemma2 ties this to head_dim
SCALING = QUERY_PRE_ATTN_SCALAR ** (-0.5)
ROPE_THETA = 10000.0         # config.rope_theta
NEG_INF = -1e30


def gemma2_attn_kernel(h_ref, wqkv_ref, wo_ref, cos_ref, sins_ref, endk_ref,
                       out_ref, qkv_s):
    kv = pl.program_id(0)
    L = h_ref.shape[0]
    half = HEAD_DIM // 2

    # ---- fused q-group/k/v projection for this kv head: one bf16 MXU pass,
    #      f32 accumulation, stored bf16 into scratch (halves scratch traffic)
    qkv_s[...] = jnp.dot(h_ref[...], wqkv_ref[...],
                         preferred_element_type=jnp.float32
                         ).astype(jnp.bfloat16)

    cos = cos_ref[...]              # (L, D) f32
    sin_signed = sins_ref[...]      # (L, D) f32, first half pre-negated

    def rope(x_bf16):
        # rotate-half via XLU lane roll (a D/2 roll is direction agnostic);
        # the [-1, +1] sign is already folded into sin_signed on the host.
        x = x_bf16.astype(jnp.float32)
        return x * cos + pltpu.roll(x, shift=half, axis=1) * sin_signed

    k_b = rope(qkv_s[:, K_OFF_G:K_OFF_G + HEAD_DIM]).astype(jnp.bfloat16)
    v_b = qkv_s[:, V_OFF_G:V_OFF_G + HEAD_DIM]          # already bf16

    # stack the GROUPS query heads sharing this kv head -> (GROUPS*L, D)
    q_grp = jnp.concatenate(
        [rope(qkv_s[:, g * HEAD_DIM:(g + 1) * HEAD_DIM]) for g in range(GROUPS)],
        axis=0).astype(jnp.bfloat16)

    # causal + same-segment (varlen / cu_seqlens) mask built in-kernel from a
    # single (1, L) row of segment-end indices (no lane-1 inputs, no transpose):
    #   mask[q, k] = (q >= k) & (q < seg_end[k])
    row = jax.lax.broadcasted_iota(jnp.int32, (GROUPS, L, L), 1
                                   ).reshape(GROUPS * L, L)
    col = jax.lax.broadcasted_iota(jnp.int32, (GROUPS * L, L), 1)
    mask_g = (row >= col) & (row < endk_ref[...])

    cap_scale = SCALING / SOFTCAP   # fold scaling + 1/softcap into one const

    # scores: (GROUPS*L, L), contract on head_dim, f32 accumulation
    s = jax.lax.dot_general(q_grp, k_b, (((1,), (1,)), ((), ())),
                            preferred_element_type=jnp.float32)
    s = SOFTCAP * jnp.tanh(s * cap_scale)      # gemma2 logit soft-cap
    s = jnp.where(mask_g, s, NEG_INF)
    # logits are bounded to +-SOFTCAP after the cap, so exp() cannot overflow;
    # max-subtraction removed (saves an XLU reduction + VPU sub per kv head).
    p = jnp.exp(s)
    p = p * pl.reciprocal(jnp.sum(p, axis=-1, keepdims=True), approx=True)

    o_grp = jnp.dot(p.astype(jnp.bfloat16), v_b,
                    preferred_element_type=jnp.float32)   # (GROUPS*L, D)
    o_heads = jnp.concatenate(
        [o_grp[g * L:(g + 1) * L, :] for g in range(GROUPS)],
        axis=1).astype(jnp.bfloat16)                      # (L, GROUPS*D)

    # partial o_proj for this kv head's heads: (L, 256) @ (256, HIDDEN)
    partial = jnp.dot(o_heads, wo_ref[...],
                      preferred_element_type=jnp.float32)

    @pl.when(kv == 0)
    def _():
        out_ref[...] = jnp.zeros_like(out_ref)
    out_ref[...] += partial


def prepare_gemma2_weights(wq, wk, wv, wo):
    """One-time preprocessing (hoisted out of the per-call path):
    groups q/k/v columns per kv head and casts everything to bf16."""
    blocks = []
    for j in range(NUM_KV_HEADS):
        qcols = wq[:, j * GROUPS * HEAD_DIM:(j + 1) * GROUPS * HEAD_DIM]
        kcols = wk[:, j * HEAD_DIM:(j + 1) * HEAD_DIM]
        vcols = wv[:, j * HEAD_DIM:(j + 1) * HEAD_DIM]
        blocks.append(jnp.concatenate([qcols, kcols, vcols], axis=1))
    wqkv_g = jnp.concatenate(blocks, axis=1).astype(jnp.bfloat16)  # (HIDDEN, 2*PER_KV)
    wo_b = wo.astype(jnp.bfloat16)                                 # (4*D, HIDDEN)
    return wqkv_g, wo_b


def gemma2_attention(hidden_states_bf16, wqkv_g, wo_b, cu_seqlens, inv_freq):
    """Glue: builds position ids / segment-end row & cos/sin, then calls the
    kernel.  cu_seqlens must be static (host-side loop), as in the varlen path."""
    L = hidden_states_bf16.shape[0]
    cu = np.asarray(cu_seqlens)
    pos = np.zeros((L,), np.float32)
    seg = np.zeros((L,), np.int32)
    endk = np.zeros((L,), np.int32)
    for s in range(len(cu) - 1):
        lo, hi = int(cu[s]), int(cu[s + 1])
        pos[lo:hi] = np.arange(hi - lo, dtype=np.float32)
        seg[lo:hi] = s
        endk[lo:hi] = hi

    pos_j = jnp.asarray(pos)
    freqs = pos_j[:, None] * inv_freq[None, :]            # (L, HEAD_DIM//2)
    emb = jnp.concatenate([freqs, freqs], axis=-1)        # (L, HEAD_DIM)
    cos = jnp.cos(emb).astype(jnp.float32)
    sin = jnp.sin(emb).astype(jnp.float32)
    sign = np.concatenate([-np.ones(HEAD_DIM // 2, np.float32),
                           np.ones(HEAD_DIM // 2, np.float32)])
    sin_signed = sin * jnp.asarray(sign)[None, :]         # sign folded in

    endk_j = jnp.asarray(endk).reshape(1, L)              # (1, L) -> 4 KiB in VMEM

    out = pl.pallas_call(
        gemma2_attn_kernel,
        out_shape=jax.ShapeDtypeStruct((L, HIDDEN), jnp.float32),
        grid=(NUM_KV_HEADS,),
        in_specs=[
            pl.BlockSpec((L, HIDDEN), lambda kv: (0, 0)),                  # hidden (bf16)
            pl.BlockSpec((HIDDEN, PER_KV), lambda kv: (0, kv)),            # grouped qkv W
            pl.BlockSpec((GROUPS * HEAD_DIM, HIDDEN), lambda kv: (kv, 0)), # o_proj W slice
            pl.BlockSpec((L, HEAD_DIM), lambda kv: (0, 0)),                # cos
            pl.BlockSpec((L, HEAD_DIM), lambda kv: (0, 0)),                # sin (signed)
            pl.BlockSpec((1, L), lambda kv: (0, 0)),                       # seg-end row
        ],
        out_specs=pl.BlockSpec((L, HIDDEN), lambda kv: (0, 0)),
        scratch_shapes=[
            pltpu.VMEM((L, PER_KV), jnp.bfloat16),   # per-kv-head fused qkv
        ],
        # kv axis accumulates into the (resident) output block -> "arbitrary".
        # TODO(synk): add a "parallel" q-tile axis for the v7x second TensorCore
        # when the flash-style (q, kv) tiling lands.
        compiler_params=pltpu.CompilerParams(
            dimension_semantics=("arbitrary",)),
    )(hidden_states_bf16, wqkv_g, wo_b, cos, sin_signed, endk_j)
    return out, cos, sin, jnp.asarray(seg)


def reference(h, wq, wk, wv, wo, cos, sin, seg):
    """Pure-JAX f32 reference of the same math (for correctness check)."""
    L = h.shape[0]
    q = (h @ wq).reshape(L, NUM_HEADS, HEAD_DIM)
    k = (h @ wk).reshape(L, NUM_KV_HEADS, HEAD_DIM)
    v = (h @ wv).reshape(L, NUM_KV_HEADS, HEAD_DIM)

    def rope(x):
        half = HEAD_DIM // 2
        x1, x2 = x[..., :half], x[..., half:]
        rot = jnp.concatenate([-x2, x1], axis=-1)
        return x * cos[:, None, :] + rot * sin[:, None, :]

    q = rope(q)
    k = rope(k)
    k = jnp.repeat(k, GROUPS, axis=1)
    v = jnp.repeat(v, GROUPS, axis=1)
    s = jnp.einsum('qhd,khd->hqk', q, k) * SCALING
    s = SOFTCAP * jnp.tanh(s / SOFTCAP)
    row = jnp.arange(L)[:, None]
    col = jnp.arange(L)[None, :]
    mask = (row >= col) & (seg[:, None] == seg[None, :])
    s = jnp.where(mask[None], s, -1e30)
    p = jax.nn.softmax(s, axis=-1)
    o = jnp.einsum('hqk,khd->qhd', p, v).reshape(L, -1)
    return o @ wo


if __name__ == "__main__":
    L = 128                            # total tokens (two packed sequences)
    cu_seqlens = [0, 64, 128]          # seq_info['cu_seqlens']

    key = jax.random.PRNGKey(0)
    k1, k2, k3, k4, k5 = jax.random.split(key, 5)
    hidden_states = jax.random.normal(k1, (L, HIDDEN), jnp.float32) * 0.5
    wq = jax.random.normal(k2, (HIDDEN, NUM_HEADS * HEAD_DIM), jnp.float32) * 0.02
    wk = jax.random.normal(k3, (HIDDEN, NUM_KV_HEADS * HEAD_DIM), jnp.float32) * 0.02
    wv = jax.random.normal(k4, (HIDDEN, NUM_KV_HEADS * HEAD_DIM), jnp.float32) * 0.02
    wo = jax.random.normal(k5, (NUM_HEADS * HEAD_DIM, HIDDEN), jnp.float32) * 0.02

    inv_freq = 1.0 / (ROPE_THETA ** (
        jnp.arange(0, HEAD_DIM, 2, dtype=jnp.float32) / HEAD_DIM))

    # one-time weight preprocessing + host-side bf16 activation cast
    wqkv_g, wo_b = prepare_gemma2_weights(wq, wk, wv, wo)
    h_bf16 = hidden_states.astype(jnp.bfloat16)

    out, cos, sin, seg = gemma2_attention(h_bf16, wqkv_g, wo_b,
                                          cu_seqlens, inv_freq)
    out = jax.block_until_ready(out)

    ref = reference(hidden_states, wq, wk, wv, wo, cos, sin, seg)
    np.testing.assert_allclose(np.asarray(out), np.asarray(ref),
                               rtol=3e-2, atol=3e-2)
    print("KERNEL_OK")
</pallas_src>

<mosaic_0001>
module attributes {stable_mosaic.version = 11 : i64} {
  func.func @gemma2_attn_kernel(%arg0: i32, %arg1: memref<128x256xbf16, #tpu.memory_space<vmem>>, %arg2: memref<256x512xbf16, #tpu.memory_space<vmem>>, %arg3: memref<256x256xbf16, #tpu.memory_space<vmem>>, %arg4: memref<128x128xf32, #tpu.memory_space<vmem>>, %arg5: memref<128x128xf32, #tpu.memory_space<vmem>>, %arg6: memref<1x128xi32, #tpu.memory_space<vmem>>, %arg7: memref<128x256xf32, #tpu.memory_space<vmem>>, %arg8: memref<128x512xbf16, #tpu.memory_space<vmem>>) attributes {dimension_semantics = [#tpu.dimension_semantics<arbitrary>], iteration_bounds = array<i64: 2>, scalar_prefetch = 0 : i64, scratch_operands = 1 : i64, tpu.core_type = #tpu.core_type<tc>, window_params = [{pipeline_mode = #tpu.pipeline_mode<synchronous>, transform_indices = @transform_0, window_bounds = array<i64: 128, 256>}, {transform_indices = @transform_1, window_bounds = array<i64: 256, 512>}, {transform_indices = @transform_2, window_bounds = array<i64: 256, 256>}, {pipeline_mode = #tpu.pipeline_mode<synchronous>, transform_indices = @transform_3, window_bounds = array<i64: 128, 128>}, {pipeline_mode = #tpu.pipeline_mode<synchronous>, transform_indices = @transform_4, window_bounds = array<i64: 128, 128>}, {pipeline_mode = #tpu.pipeline_mode<synchronous>, transform_indices = @transform_5, window_bounds = array<i64: 1, 128>}, {pipeline_mode = #tpu.pipeline_mode<synchronous>, transform_indices = @transform_6, window_bounds = array<i64: 128, 256>}]} {
    %c0 = arith.constant 0 : index
    %c0_0 = arith.constant 0 : index
    %0 = vector.load %arg1[%c0, %c0_0] : memref<128x256xbf16, #tpu.memory_space<vmem>>, vector<128x256xbf16>
    %c0_1 = arith.constant 0 : index
    %c0_2 = arith.constant 0 : index
    %1 = vector.load %arg2[%c0_1, %c0_2] : memref<256x512xbf16, #tpu.memory_space<vmem>>, vector<256x512xbf16>
    %cst = arith.constant dense<0.000000e+00> : vector<128x512xf32>
    %2 = tpu.matmul %0, %1, %cst {dimension_numbers = #tpu.dot_dimension_numbers<[1], [0], [0], [1], [0, 0, 1, 1], [], []>} : vector<128x256xbf16>, vector<256x512xbf16>, vector<128x512xf32> -> vector<128x512xf32>
    %3 = arith.truncf %2 : vector<128x512xf32> to vector<128x512xbf16>
    %c0_3 = arith.constant 0 : index
    %c0_4 = arith.constant 0 : index
    %4 = vector.load %arg8[%c0_3, %c0_4] : memref<128x512xbf16, #tpu.memory_space<vmem>>, vector<128x512xbf16>
    tpu.vector_store %arg8[%c0_3, %c0_4], %3 {strides = array<i32>} : memref<128x512xbf16, #tpu.memory_space<vmem>>, vector<128x512xbf16>,
    %c0_5 = arith.constant 0 : index
    %c0_6 = arith.constant 0 : index
    %5 = vector.load %arg4[%c0_5, %c0_6] : memref<128x128xf32, #tpu.memory_space<vmem>>, vector<128x128xf32>
    %c0_7 = arith.constant 0 : index
    %c0_8 = arith.constant 0 : index
    %6 = vector.load %arg5[%c0_7, %c0_8] : memref<128x128xf32, #tpu.memory_space<vmem>>, vector<128x128xf32>
    %c0_9 = arith.constant 0 : index
    %c256 = arith.constant 256 : index
    %7 = vector.load %arg8[%c0_9, %c256] : memref<128x512xbf16, #tpu.memory_space<vmem>>, vector<128x128xbf16>
    %8 = arith.extf %7 : vector<128x128xbf16> to vector<128x128xf32>
    %9 = arith.mulf %8, %5 : vector<128x128xf32>
    %c64_i32 = arith.constant 64 : i32
    %10 = tpu.dynamic_rotate %8 by %c64_i32 dim 1 : vector<128x128xf32>, i32 -> vector<128x128xf32>
    %11 = arith.mulf %10, %6 : vector<128x128xf32>
    %12 = arith.addf %9, %11 : vector<128x128xf32>
    %13 = arith.truncf %12 : vector<128x128xf32> to vector<128x128xbf16>
    %c0_10 = arith.constant 0 : index
    %c384 = arith.constant 384 : index
    %14 = vector.load %arg8[%c0_10, %c384] : memref<128x512xbf16, #tpu.memory_space<vmem>>, vector<128x128xbf16>
    %c0_11 = arith.constant 0 : index
    %c0_12 = arith.constant 0 : index
    %15 = vector.load %arg8[%c0_11, %c0_12] : memref<128x512xbf16, #tpu.memory_space<vmem>>, vector<128x128xbf16>
    %16 = arith.extf %15 : vector<128x128xbf16> to vector<128x128xf32>
    %17 = arith.mulf %16, %5 : vector<128x128xf32>
    %c64_i32_13 = arith.constant 64 : i32
    %18 = tpu.dynamic_rotate %16 by %c64_i32_13 dim 1 : vector<128x128xf32>, i32 -> vector<128x128xf32>
    %19 = arith.mulf %18, %6 : vector<128x128xf32>
    %20 = arith.addf %17, %19 : vector<128x128xf32>
    %c0_14 = arith.constant 0 : index
    %c128 = arith.constant 128 : index
    %21 = vector.load %arg8[%c0_14, %c128] : memref<128x512xbf16, #tpu.memory_space<vmem>>, vector<128x128xbf16>
    %22 = arith.extf %21 : vector<128x128xbf16> to vector<128x128xf32>
    %23 = arith.mulf %22, %5 : vector<128x128xf32>
    %c64_i32_15 = arith.constant 64 : i32
    %24 = tpu.dynamic_rotate %22 by %c64_i32_15 dim 1 : vector<128x128xf32>, i32 -> vector<128x128xf32>
    %25 = arith.mulf %24, %6 : vector<128x128xf32>
    %26 = arith.addf %23, %25 : vector<128x128xf32>
    %27 = tpu.concatenate %20, %26 in 0 : vector<128x128xf32>, vector<128x128xf32> -> vector<256x128xf32>
    %28 = arith.truncf %27 : vector<256x128xf32> to vector<256x128xbf16>
    %29 = tpu.iota {dimensions = array<i32: 1>} : vector<2x128x128xi32>
    %30 = vector.shape_cast %29 : vector<2x128x128xi32> to vector<256x128xi32>
    %31 = tpu.iota {dimensions = array<i32: 1>} : vector<256x128xi32>
    %32 = arith.cmpi sge, %30, %31 : vector<256x128xi32>
    %c0_16 = arith.constant 0 : index
    %c0_17 = arith.constant 0 : index
    %33 = vector.load %arg6[%c0_16, %c0_17] : memref<1x128xi32, #tpu.memory_space<vmem>>, vector<1x128xi32>
    %34 = vector.broadcast %33 : vector<1x128xi32> to vector<256x128xi32>
    %35 = arith.cmpi slt, %30, %34 : vector<256x128xi32>
    %36 = arith.andi %32, %35 : vector<256x128xi1>
    %cst_18 = arith.constant dense<0.000000e+00> : vector<256x128xf32>
    %37 = tpu.matmul %28, %13, %cst_18 {dimension_numbers = #tpu.dot_dimension_numbers<[1], [1], [0], [0], [0, 0, 1, 0], [], []>} : vector<256x128xbf16>, vector<128x128xbf16>, vector<256x128xf32> -> vector<256x128xf32>
    %cst_19 = arith.constant 0.00176776689 : f32
    %38 = vector.broadcast %cst_19 : f32 to vector<256x128xf32>
    %39 = arith.mulf %37, %38 : vector<256x128xf32>
    %40 = math.tanh %39 : vector<256x128xf32>
    %cst_20 = arith.constant 5.000000e+01 : f32
    %41 = vector.broadcast %cst_20 : f32 to vector<256x128xf32>
    %42 = arith.mulf %41, %40 : vector<256x128xf32>
    %cst_21 = arith.constant -1.000000e+30 : f32
    %43 = vector.broadcast %cst_21 : f32 to vector<256x128xf32>
    %44 = arith.select %36, %42, %43 : vector<256x128xi1>, vector<256x128xf32>
    %45 = math.exp %44 : vector<256x128xf32>
    %cst_22 = arith.constant dense<0.000000e+00> : vector<256xf32>
    %46 = vector.multi_reduction <add>, %45, %cst_22 [1] : vector<256x128xf32> to vector<256xf32>
    %47 = vector.shape_cast %46 : vector<256xf32> to vector<256x1xf32>
    %48 = tpu.reciprocal %47 {approx = true} : vector<256x1xf32> -> vector<256x1xf32>
    %49 = vector.broadcast %48 : vector<256x1xf32> to vector<256x128xf32>
    %50 = arith.mulf %45, %49 : vector<256x128xf32>
    %51 = arith.truncf %50 : vector<256x128xf32> to vector<256x128xbf16>
    %cst_23 = arith.constant dense<0.000000e+00> : vector<256x128xf32>
    %52 = tpu.matmul %51, %14, %cst_23 {dimension_numbers = #tpu.dot_dimension_numbers<[1], [0], [0], [1], [0, 0, 1, 1], [], []>} : vector<256x128xbf16>, vector<128x128xbf16>, vector<256x128xf32> -> vector<256x128xf32>
    %53 = vector.extract_strided_slice %52 {offsets = [0, 0], sizes = [128, 128], strides = [1, 1]} : vector<256x128xf32> to vector<128x128xf32>
    %54 = vector.extract_strided_slice %52 {offsets = [128, 0], sizes = [128, 128], strides = [1, 1]} : vector<256x128xf32> to vector<128x128xf32>
    %55 = tpu.concatenate %53, %54 in 1 : vector<128x128xf32>, vector<128x128xf32> -> vector<128x256xf32>
    %56 = arith.truncf %55 : vector<128x256xf32> to vector<128x256xbf16>
    %c0_24 = arith.constant 0 : index
    %c0_25 = arith.constant 0 : index
    %57 = vector.load %arg3[%c0_24, %c0_25] : memref<256x256xbf16, #tpu.memory_space<vmem>>, vector<256x256xbf16>
    %cst_26 = arith.constant dense<0.000000e+00> : vector<128x256xf32>
    %58 = tpu.matmul %56, %57, %cst_26 {dimension_numbers = #tpu.dot_dimension_numbers<[1], [0], [0], [1], [0, 0, 1, 1], [], []>} : vector<128x256xbf16>, vector<256x256xbf16>, vector<128x256xf32> -> vector<128x256xf32>
    %c0_i32 = arith.constant 0 : i32
    %59 = arith.cmpi eq, %arg0, %c0_i32 : i32
    %60 = arith.extui %59 : i1 to i32
    %c0_i32_27 = arith.constant 0 : i32
    %61 = arith.cmpi ne, %60, %c0_i32_27 : i32
    scf.if %61 {
      %cst_32 = arith.constant 0.000000e+00 : f32
      %65 = vector.broadcast %cst_32 : f32 to vector<128x256xf32>
      %c0_33 = arith.constant 0 : index
      %c0_34 = arith.constant 0 : index
      %66 = vector.load %arg7[%c0_33, %c0_34] : memref<128x256xf32, #tpu.memory_space<vmem>>, vector<128x256xf32>
      tpu.vector_store %arg7[%c0_33, %c0_34], %65 {strides = array<i32>} : memref<128x256xf32, #tpu.memory_space<vmem>>, vector<128x256xf32>,
    } else {
    }
    %c0_28 = arith.constant 0 : index
    %c0_29 = arith.constant 0 : index
    %62 = vector.load %arg7[%c0_28, %c0_29] : memref<128x256xf32, #tpu.memory_space<vmem>>, vector<128x256xf32>
    %63 = arith.addf %62, %58 : vector<128x256xf32>
    %c0_30 = arith.constant 0 : index
    %c0_31 = arith.constant 0 : index
    %64 = vector.load %arg7[%c0_30, %c0_31] : memref<128x256xf32, #tpu.memory_space<vmem>>, vector<128x256xf32>
    tpu.vector_store %arg7[%c0_30, %c0_31], %63 {strides = array<i32>} : memref<128x256xf32, #tpu.memory_space<vmem>>, vector<128x256xf32>,
    return
  }
  func.func @transform_0(%arg0: i32) -> (i32, i32) {
    %c0_i32 = arith.constant 0 : i32
    %c0_i32_0 = arith.constant 0 : i32
    %c0_i32_1 = arith.constant 0 : i32
    return %c0_i32, %c0_i32_0 : i32, i32
  }
  func.func @transform_1(%arg0: i32) -> (i32, i32) {
    %c0_i32 = arith.constant 0 : i32
    %c0_i32_0 = arith.constant 0 : i32
    return %c0_i32, %arg0 : i32, i32
  }
  func.func @transform_2(%arg0: i32) -> (i32, i32) {
    %c0_i32 = arith.constant 0 : i32
    %c0_i32_0 = arith.constant 0 : i32
    return %arg0, %c0_i32 : i32, i32
  }
  func.func @transform_3(%arg0: i32) -> (i32, i32) {
    %c0_i32 = arith.constant 0 : i32
    %c0_i32_0 = arith.constant 0 : i32
    %c0_i32_1 = arith.constant 0 : i32
    return %c0_i32, %c0_i32_0 : i32, i32
  }
  func.func @transform_4(%arg0: i32) -> (i32, i32) {
    %c0_i32 = arith.constant 0 : i32
    %c0_i32_0 = arith.constant 0 : i32
    %c0_i32_1 = arith.constant 0 : i32
    return %c0_i32, %c0_i32_0 : i32, i32
  }
  func.func @transform_5(%arg0: i32) -> (i32, i32) {
    %c0_i32 = arith.constant 0 : i32
    %c0_i32_0 = arith.constant 0 : i32
    %c0_i32_1 = arith.constant 0 : i32
    return %c0_i32, %c0_i32_0 : i32, i32
  }
  func.func @transform_6(%arg0: i32) -> (i32, i32) {
    %c0_i32 = arith.constant 0 : i32
    %c0_i32_0 = arith.constant 0 : i32
    %c0_i32_1 = arith.constant 0 : i32
    return %c0_i32, %c0_i32_0 : i32, i32
  }
}

</mosaic_0001>

<llo_original>
// kernel: tpu_custom_call.1
$region0: #{tpu_custom_call.1}
  #allocation0 [shape = 'u32[]', space=smem, size = 0x4, offset = 0x4, fixed_abs, tag = 'smem constant byte address 0x4 - core index']
  #allocation1 [shape = 'u32[144,128]{1,0:T(1,128)}', space=vmem, size = 0x12000, scoped, tag = 'internal scratch']
  #allocation2 [shape = 'bf16[128,512]{1,0:T(8,128)(2,1)}', space=vmem, size = 0x20000, scoped, tag = 'scratch operand']
  %s0 = inlined_call_operand.hbm [shape: bf16[128,256], index: 0, kind: input, shape index: {}]
  %s1 = inlined_call_operand.hbm [shape: bf16[256,1024], index: 1, kind: input, shape index: {}]
  %s2 = inlined_call_operand.hbm [shape: bf16[512,256], index: 2, kind: input, shape index: {}]
  %s3 = inlined_call_operand.hbm [shape: f32[128,128], index: 3, kind: input, shape index: {}]
  %s4 = inlined_call_operand.hbm [shape: f32[128,128], index: 4, kind: input, shape index: {}]
  %s5 = inlined_call_operand.vmem [shape: s32[1,128], index: 5, kind: input, shape index: {}]
  %s6 = inlined_call_operand.hbm [shape: f32[128,256], index: 6, kind: output, shape index: {}]
  %s7 = sld [smem:[#allocation0]]
  $region81: #{tpu_custom_call.1} parent=0
    _
  %s9 = ssub.s32 1, %s7
  %s10 = scalar_select 0, %s9, %s7
  $region1: #{tpu_custom_call.1} parent=0
    #allocation3 [shape = 'u8[65536]{0}', space=vmem, size = 0x10000, scoped, tag = 'input window, operand 0, single buffered']
    #allocation4 [shape = 's32[2]{0}', space=sflag, size = 0x8, scoped, tag = 'scoped memory for tpu_custom_call.1']
    #allocation5 [shape = 's32[2]{0}', space=sflag, size = 0x8, scoped, tag = 'scoped memory for tpu_custom_call.1']
    #allocation6 [shape = 'u8[524288]{0}', space=vmem, size = 0x80000, scoped, tag = 'input window, operand 1']
    #allocation7 [shape = 's32[2]{0}', space=sflag, size = 0x8, scoped, tag = 'scoped memory for tpu_custom_call.1']
    #allocation8 [shape = 'u8[262144]{0}', space=vmem, size = 0x40000, scoped, tag = 'input window, operand 2']
    #allocation9 [shape = 'u8[65536]{0}', space=vmem, size = 0x10000, scoped, tag = 'input window, operand 3, single buffered']
    #allocation10 [shape = 's32[1]{0}', space=sflag, size = 0x4, scoped, tag = 'scoped memory for tpu_custom_call.1']
    #allocation11 [shape = 'u8[65536]{0}', space=vmem, size = 0x10000, scoped, tag = 'input window, operand 4, single buffered']
    #allocation12 [shape = 'u8[131072]{0}', space=vmem, size = 0x20000, scoped, tag = 'output window, operand 0, single buffered']
    %11 = vsyncpa [#allocation4], 0
    %12 = vsyncpa [#allocation7], 0
    %s13 = scalar_lea.sflag [#allocation7], 1
    %14 = vsyncpa %s13, 0
    %15 = vsyncpa [#allocation10], 0
    %16 = vsyncpa [#allocation5], 0
    loop: start=0, step=1, limit=4
    $region2: #{tpu_custom_call.1} parent=1 // loop_pre_header
      _
    $region3: #{tpu_custom_call.1} parent=1 // loop_header
      %s18 = sphi 0, %s22
      %p19 = scmp.ge.s32.totalorder %s18, 4
      %s26 = sphi 0, %s26
      %s28 = sphi 0, %s26
      %s29 = sphi 0, %s28
      %s43 = sphi 0, %s29
      %s49 = sphi 0, %s51
      %s52 = sphi 0, %s49
      %s53 = sphi 0, %s52
      %s69 = sphi 0, %s53
      %s75 = sphi 0, %s77
      %s78 = sphi 0, %s75
      %s79 = sphi 0, %s78
      %s95 = sphi 0, %s79
      %s99 = sphi 0, %s99
      %s101 = sphi 0, %s99
      %s102 = sphi 0, %s101
      %s116 = sphi 0, %s102
      %s120 = sphi 0, %s120
      %s122 = sphi 0, %s120
      %s123 = sphi 0, %s122
      %s137 = sphi 0, %s123
      %s141 = sphi 0, %s141
      %s143 = sphi 0, %s141
      %s144 = sphi 0, %s143
      %s158 = sphi 0, %s144
      %s162 = sphi 0, %s162
      %s164 = sphi 0, %s162
      %s165 = sphi 0, %s164
      %s179 = sphi 0, %s165
    $region4: #{tpu_custom_call.1} parent=1 // loop_header_branch
      %21 = sbr.rel (%p19) target = $region8
    $region5: #{tpu_custom_call.1} parent=1 // loop_body
      %s23 = ssub.s32 %s18, 1
      %s24 = ssub.s32 %s18, 2
      %s25 = sadd.s32 %s18, 1
      %s27 = sadd.s32 %s26, 1
      %p30 = scmp.eq.s32.totalorder %s18, 1
      %p31 = scmp.ne.s32.totalorder %s26, %s28
      %p32 = scmp.eq.s32.totalorder %s18, 0
      %p33 = por %p31, %p32
      %p34 = scmp.ne.s32.totalorder %s26, %s28
      %p35 = scmp.eq.s32.totalorder %s23, 1
      %p36 = por %p34, %p35
      %p37 = scmp.ne.s32.totalorder %s28, %s29
      %p38 = scmp.eq.s32.totalorder %s23, 0
      %p39 = por %p37, %p38
      %p40 = scmp.ne.s32.totalorder %s28, %s29
      %p41 = scmp.eq.s32.totalorder %s24, 1
      %p42 = por %p40, %p41
      %p44 = scmp.ne.s32.totalorder %s29, %s43
      %p45 = scmp.eq.s32.totalorder %s24, 0
      %p46 = por %p44, %p45
      %s47 = ssub.s32 %s18, %s25
      %p48 = scmp.eq.s32.totalorder %s47, 0
      %s50 = sadd.s32 %s49, 1
      %s51 = scalar_select %p48, %s49, %s50
      %p54 = pneg %p48
      %p55 = scmp.eq.s32.totalorder %s18, 1
      %p56 = por %p54, %p55
      %p57 = scmp.ne.s32.totalorder %s49, %s52
      %p58 = scmp.eq.s32.totalorder %s18, 0
      %p59 = por %p57, %p58
      %p60 = scmp.ne.s32.totalorder %s49, %s52
      %p61 = scmp.eq.s32.totalorder %s23, 1
      %p62 = por %p60, %p61
      %p63 = scmp.ne.s32.totalorder %s52, %s53
      %p64 = scmp.eq.s32.totalorder %s23, 0
      %p65 = por %p63, %p64
      %p66 = scmp.ne.s32.totalorder %s52, %s53
      %p67 = scmp.eq.s32.totalorder %s24, 1
      %p68 = por %p66, %p67
      %p70 = scmp.ne.s32.totalorder %s53, %s69
      %p71 = scmp.eq.s32.totalorder %s24, 0
      %p72 = por %p70, %p71
      %s73 = ssub.s32 %s18, %s25
      %p74 = scmp.eq.s32.totalorder %s73, 0
      %s76 = sadd.s32 %s75, 1
      %s77 = scalar_select %p74, %s75, %s76
      %p80 = pneg %p74
      %p81 = scmp.eq.s32.totalorder %s18, 1
      %p82 = por %p80, %p81
      %p83 = scmp.ne.s32.totalorder %s75, %s78
      %p84 = scmp.eq.s32.totalorder %s18, 0
      %p85 = por %p83, %p84
      %p86 = scmp.ne.s32.totalorder %s75, %s78
      %p87 = scmp.eq.s32.totalorder %s23, 1
      %p88 = por %p86, %p87
      %p89 = scmp.ne.s32.totalorder %s78, %s79
      %p90 = scmp.eq.s32.totalorder %s23, 0
      %p91 = por %p89, %p90
      %p92 = scmp.ne.s32.totalorder %s78, %s79
      %p93 = scmp.eq.s32.totalorder %s24, 1
      %p94 = por %p92, %p93
      %p96 = scmp.ne.s32.totalorder %s79, %s95
      %p97 = scmp.eq.s32.totalorder %s24, 0
      %p98 = por %p96, %p97
      %s100 = sadd.s32 %s99, 1
      %p103 = scmp.eq.s32.totalorder %s18, 1
      %p104 = scmp.ne.s32.totalorder %s99, %s101
      %p105 = scmp.eq.s32.totalorder %s18, 0
      %p106 = por %p104, %p105
      %p107 = scmp.ne.s32.totalorder %s99, %s101
      %p108 = scmp.eq.s32.totalorder %s23, 1
      %p109 = por %p107, %p108
      %p110 = scmp.ne.s32.totalorder %s101, %s102
      %p111 = scmp.eq.s32.totalorder %s23, 0
      %p112 = por %p110, %p111
      %p113 = scmp.ne.s32.totalorder %s101, %s102
      %p114 = scmp.eq.s32.totalorder %s24, 1
      %p115 = por %p113, %p114
      %p117 = scmp.ne.s32.totalorder %s102, %s116
      %p118 = scmp.eq.s32.totalorder %s24, 0
      %p119 = por %p117, %p118
      %s121 = sadd.s32 %s120, 1
      %p124 = scmp.eq.s32.totalorder %s18, 1
      %p125 = scmp.ne.s32.totalorder %s120, %s122
      %p126 = scmp.eq.s32.totalorder %s18, 0
      %p127 = por %p125, %p126
      %p128 = scmp.ne.s32.totalorder %s120, %s122
      %p129 = scmp.eq.s32.totalorder %s23, 1
      %p130 = por %p128, %p129
      %p131 = scmp.ne.s32.totalorder %s122, %s123
      %p132 = scmp.eq.s32.totalorder %s23, 0
      %p133 = por %p131, %p132
      %p134 = scmp.ne.s32.totalorder %s122, %s123
      %p135 = scmp.eq.s32.totalorder %s24, 1
      %p136 = por %p134, %p135
      %p138 = scmp.ne.s32.totalorder %s123, %s137
      %p139 = scmp.eq.s32.totalorder %s24, 0
      %p140 = por %p138, %p139
      %s142 = sadd.s32 %s141, 1
      %p145 = scmp.eq.s32.totalorder %s18, 1
      %p146 = scmp.ne.s32.totalorder %s141, %s143
      %p147 = scmp.eq.s32.totalorder %s18, 0
      %p148 = por %p146, %p147
      %p149 = scmp.ne.s32.totalorder %s141, %s143
      %p150 = scmp.eq.s32.totalorder %s23, 1
      %p151 = por %p149, %p150
      %p152 = scmp.ne.s32.totalorder %s143, %s144
      %p153 = scmp.eq.s32.totalorder %s23, 0
      %p154 = por %p152, %p153
      %p155 = scmp.ne.s32.totalorder %s143, %s144
      %p156 = scmp.eq.s32.totalorder %s24, 1
      %p157 = por %p155, %p156
      %p159 = scmp.ne.s32.totalorder %s144, %s158
      %p160 = scmp.eq.s32.totalorder %s24, 0
      %p161 = por %p159, %p160
      %s163 = sadd.s32 %s162, 1
      %p166 = scmp.eq.s32.totalorder %s18, 1
      %p167 = scmp.ne.s32.totalorder %s162, %s164
      %p168 = scmp.eq.s32.totalorder %s18, 0
      %p169 = por %p167, %p168
      %p170 = scmp.ne.s32.totalorder %s162, %s164
      %p171 = scmp.eq.s32.totalorder %s23, 1
      %p172 = por %p170, %p171
      %p173 = scmp.ne.s32.totalorder %s164, %s165
      %p174 = scmp.eq.s32.totalorder %s23, 0
      %p175 = por %p173, %p174
      %p176 = scmp.ne.s32.totalorder %s164, %s165
      %p177 = scmp.eq.s32.totalorder %s24, 1
      %p178 = por %p176, %p177
      %p180 = scmp.ne.s32.totalorder %s165, %s179
      %p181 = scmp.eq.s32.totalorder %s24, 0
      %p182 = por %p180, %p181
      %p183 = scmp.le.s32.totalorder 1, %s18
      %p184 = scmp.lt.s32.totalorder %s18, 3
      %p185 = pnand %p183, %p184
      %p186 = pneg %p185
      // Predicated region
      $region9: #{tpu_custom_call.1} parent=5 // pred_check
        _
      $region10: #{tpu_custom_call.1} parent=5 // pred_check_branch
        %188 = sbr.rel (%p185) target = $region12
      $region11: #{tpu_custom_call.1} parent=5 // pred_region
        %s189 = ssub.s32 %s18, 1
        // Predicated region
        $region13: #{tpu_custom_call.1} parent=11 // pred_check
          %p190 = pneg %p39
        $region14: #{tpu_custom_call.1} parent=11 // pred_check_branch
          %192 = sbr.rel (%p190) target = $region16
        $region15: #{tpu_custom_call.1} parent=11 // pred_region
          %s194 = ssub.s32 2048, 2048
          %195 = vsyncadd [#allocation4], %s194
          %s196 = sshll.u32 [#allocation3], 4
          %s197 = int_to_ptr.vmem [resolvable:$true] %s196
          %202 = dma.hbm_to_vmem [thread:$0]  %s0, 2048, %s197, [#allocation4], 128, 128, 8
        $region16: #{tpu_custom_call.1} parent=11 // pred_fallthru
          _
        // Predicated region
        $region17: #{tpu_custom_call.1} parent=11 // pred_check
          %p203 = pneg %p112
        $region18: #{tpu_custom_call.1} parent=11 // pred_check_branch
          %205 = sbr.rel (%p203) target = $region20
        $region19: #{tpu_custom_call.1} parent=11 // pred_region
          %s207 = ssub.s32 2048, 2048
          %208 = vsyncadd [#allocation10], %s207
          %s209 = sshll.u32 [#allocation9], 4
          %s210 = int_to_ptr.vmem [resolvable:$true] %s209
          %215 = dma.hbm_to_vmem [thread:$0]  %s3, 2048, %s210, [#allocation10], 128, 128, 8
        $region20: #{tpu_custom_call.1} parent=11 // pred_fallthru
          _
        // Predicated region
        $region21: #{tpu_custom_call.1} parent=11 // pred_check
          %p216 = pneg %p133
        $region22: #{tpu_custom_call.1} parent=11 // pred_check_branch
          %218 = sbr.rel (%p216) target = $region24
        $region23: #{tpu_custom_call.1} parent=11 // pred_region
          %s220 = ssub.s32 2048, 2048
          %221 = vsyncadd [#allocation10], %s220
          %s222 = sshll.u32 [#allocation11], 4
          %s223 = int_to_ptr.vmem [resolvable:$true] %s222
          %228 = dma.hbm_to_vmem [thread:$0]  %s4, 2048, %s223, [#allocation10], 128, 128, 8
        $region24: #{tpu_custom_call.1} parent=11 // pred_fallthru
          _
        // Predicated region
        $region25: #{tpu_custom_call.1} parent=11 // pred_check
          %p229 = pneg %p154
        $region26: #{tpu_custom_call.1} parent=11 // pred_check_branch
          %231 = sbr.rel (%p229) target = $region28
        $region27: #{tpu_custom_call.1} parent=11 // pred_region
          _
        $region28: #{tpu_custom_call.1} parent=11 // pred_fallthru
          _
      $region12: #{tpu_custom_call.1} parent=5 // pred_fallthru
        _
      %p232 = scmp.lt.s32.totalorder %s18, 2
      // Predicated region
      $region29: #{tpu_custom_call.1} parent=5 // pred_check
        %p233 = pneg %p232
      $region30: #{tpu_custom_call.1} parent=5 // pred_check_branch
        %235 = sbr.rel (%p233) target = $region32
      $region31: #{tpu_custom_call.1} parent=5 // pred_region
        // Predicated region
        $region33: #{tpu_custom_call.1} parent=31 // pred_check
          %p236 = pneg %p59
        $region34: #{tpu_custom_call.1} parent=31 // pred_check_branch
          %238 = sbr.rel (%p236) target = $region36
        $region35: #{tpu_custom_call.1} parent=31 // pred_region
          %s239 = sand.u32 %s18, 1
          %s240 = scalar_lea.sflag [#allocation7], %s239
          %s241 = sand.u32 %s49, 1
          %s242 = smul.addr %s241, 512
          %s243 = scalar_lea.vmem [#allocation6], %s242
          %s244 = smul.u32 4, %s18
          %s246 = ssub.s32 8192, 8192
          %247 = vsyncadd %s240, %s246
          %s248 = smul.addr %s244, 64
          %s249 = scalar_lea.hbm %s1, %s248
          %s250 = sshll.u32 %s243, 4
          %s251 = int_to_ptr.vmem [resolvable:$true] %s250
          %256 = dma.hbm_to_vmem [thread:$0]  %s249, 8192, %s251, %s240, 512, 256, 16
        $region36: #{tpu_custom_call.1} parent=31 // pred_fallthru
          _
        // Predicated region
        $region37: #{tpu_custom_call.1} parent=31 // pred_check
          %p257 = pneg %p85
        $region38: #{tpu_custom_call.1} parent=31 // pred_check_branch
          %259 = sbr.rel (%p257) target = $region40
        $region39: #{tpu_custom_call.1} parent=31 // pred_region
          %s260 = sand.u32 %s18, 1
          %s261 = scalar_lea.sflag [#allocation7], %s260
          %s262 = sand.u32 %s75, 1
          %s263 = smul.addr %s262, 256
          %s264 = scalar_lea.vmem [#allocation8], %s263
          %s265 = smul.u32 32, %s18
          %s267 = ssub.s32 4096, 4096
          %268 = vsyncadd %s261, %s267
          %s269 = smul.addr %s265, 2
          %s270 = smul.addr %s269, 64
          %s271 = scalar_lea.hbm %s2, %s270
          %s272 = sshll.u32 %s264, 4
          %s273 = int_to_ptr.vmem [resolvable:$true] %s272
          %278 = dma.hbm_to_vmem [thread:$0]  %s271, 4096, %s273, %s261, 128, 128, 8
        $region40: #{tpu_custom_call.1} parent=31 // pred_fallthru
          _
      $region32: #{tpu_custom_call.1} parent=5 // pred_fallthru
        _
      %p279 = scmp.le.s32.totalorder 1, %s18
      %p280 = scmp.lt.s32.totalorder %s18, 3
      %p281 = pnand %p279, %p280
      %p282 = pneg %p281
      // Predicated region
      $region41: #{tpu_custom_call.1} parent=5 // pred_check
        _
      $region42: #{tpu_custom_call.1} parent=5 // pred_check_branch
        %284 = sbr.rel (%p281) target = $region44
      $region43: #{tpu_custom_call.1} parent=5 // pred_region
        %s285 = ssub.s32 %s18, 1
        // Predicated region
        $region45: #{tpu_custom_call.1} parent=43 // pred_check
          %p286 = pneg %p39
        $region46: #{tpu_custom_call.1} parent=43 // pred_check_branch
          %288 = sbr.rel (%p286) target = $region48
        $region47: #{tpu_custom_call.1} parent=43 // pred_region
          %289 = dma.done [#allocation4], 2048
        $region48: #{tpu_custom_call.1} parent=43 // pred_fallthru
          _
        %s290 = sand.u32 %s23, 1
        %s291 = scalar_lea.sflag [#allocation7], %s290
        %s292 = sand.u32 %s52, 1
        %s293 = smul.addr %s292, 512
        %s294 = scalar_lea.vmem [#allocation6], %s293
        // Predicated region
        $region49: #{tpu_custom_call.1} parent=43 // pred_check
          %p295 = pneg %p65
        $region50: #{tpu_custom_call.1} parent=43 // pred_check_branch
          %297 = sbr.rel (%p295) target = $region52
        $region51: #{tpu_custom_call.1} parent=43 // pred_region
          %298 = dma.done %s291, 8192
        $region52: #{tpu_custom_call.1} parent=43 // pred_fallthru
          _
        %s299 = sand.u32 %s23, 1
        %s300 = scalar_lea.sflag [#allocation7], %s299
        %s301 = sand.u32 %s78, 1
        %s302 = smul.addr %s301, 256
        %s303 = scalar_lea.vmem [#allocation8], %s302
        // Predicated region
        $region53: #{tpu_custom_call.1} parent=43 // pred_check
          %p304 = pneg %p91
        $region54: #{tpu_custom_call.1} parent=43 // pred_check_branch
          %306 = sbr.rel (%p304) target = $region56
        $region55: #{tpu_custom_call.1} parent=43 // pred_region
          %307 = dma.done %s300, 4096
        $region56: #{tpu_custom_call.1} parent=43 // pred_fallthru
          _
        // Predicated region
        $region57: #{tpu_custom_call.1} parent=43 // pred_check
          %p308 = pneg %p112
        $region58: #{tpu_custom_call.1} parent=43 // pred_check_branch
          %310 = sbr.rel (%p308) target = $region60
        $region59: #{tpu_custom_call.1} parent=43 // pred_region
          %311 = dma.done [#allocation10], 2048
        $region60: #{tpu_custom_call.1} parent=43 // pred_fallthru
          _
        // Predicated region
        $region61: #{tpu_custom_call.1} parent=43 // pred_check
          %p312 = pneg %p133
        $region62: #{tpu_custom_call.1} parent=43 // pred_check_branch
          %314 = sbr.rel (%p312) target = $region64
        $region63: #{tpu_custom_call.1} parent=43 // pred_region
          %315 = dma.done [#allocation10], 2048
        $region64: #{tpu_custom_call.1} parent=43 // pred_fallthru
          _
        %p316 = pneg %p39
        %p317 = pneg %p36
        %s318 = sand.u32 %s23, 1
        %s319 = scalar_lea.sflag [#allocation7], %s318
        %s320 = sand.u32 %s52, 1
        %s321 = smul.addr %s320, 512
        %s322 = scalar_lea.vmem [#allocation6], %s321
        %p323 = pneg %p65
        %p324 = pneg %p62
        %s325 = sand.u32 %s23, 1
        %s326 = scalar_lea.sflag [#allocation7], %s325
        %s327 = sand.u32 %s78, 1
        %s328 = smul.addr %s327, 256
        %s329 = scalar_lea.vmem [#allocation8], %s328
        %p330 = pneg %p91
        %p331 = pneg %p88
        %p332 = pneg %p112
        %p333 = pneg %p109
        %p334 = pneg %p133
        %p335 = pneg %p130
        %p336 = pneg %p154
        %p337 = pneg %p151
        %p338 = pneg %p175
        %p339 = pneg %p172
        %s340 = smul.u32 4, %s23
        %s341 = smul.u32 32, %s23
        %v343 = vld [vmem:[#allocation3] sm:$0xff]
        %v344 = vld [vmem:[#allocation3 + $0x8] sm:$0xff]
        %v345 = vld [vmem:[#allocation3 + $0x10] sm:$0xff]
        %v346 = vld [vmem:[#allocation3 + $0x18] sm:$0xff]
        %v347 = vld [vmem:[#allocation3 + $0x20] sm:$0xff]
        %v348 = vld [vmem:[#allocation3 + $0x28] sm:$0xff]
        %v349 = vld [vmem:[#allocation3 + $0x30] sm:$0xff]
        %v350 = vld [vmem:[#allocation3 + $0x38] sm:$0xff]
        %v351 = vld [vmem:[#allocation3 + $0x40] sm:$0xff]
        %v352 = vld [vmem:[#allocation3 + $0x48] sm:$0xff]
        %v353 = vld [vmem:[#allocation3 + $0x50] sm:$0xff]
        %v354 = vld [vmem:[#allocation3 + $0x58] sm:$0xff]
        %v355 = vld [vmem:[#allocation3 + $0x60] sm:$0xff]
        %v356 = vld [vmem:[#allocation3 + $0x68] sm:$0xff]
        %v357 = vld [vmem:[#allocation3 + $0x70] sm:$0xff]
        %v358 = vld [vmem:[#allocation3 + $0x78] sm:$0xff]
        %v359 = vld [vmem:[%s294] sm:$0xff]
        %v360 = vld [vmem:[%s294 + $0x8] sm:$0xff]
        %v361 = vld [vmem:[%s294 + $0x10] sm:$0xff]
        %v362 = vld [vmem:[%s294 + $0x18] sm:$0xff]
        %v363 = vld [vmem:[%s294 + $0x20] sm:$0xff]
        %v364 = vld [vmem:[%s294 + $0x28] sm:$0xff]
        %v365 = vld [vmem:[%s294 + $0x30] sm:$0xff]
        %v366 = vld [vmem:[%s294 + $0x38] sm:$0xff]
        %v367 = vld [vmem:[%s294 + $0x40] sm:$0xff]
        %v368 = vld [vmem:[%s294 + $0x48] sm:$0xff]
        %v369 = vld [vmem:[%s294 + $0x50] sm:$0xff]
        %v370 = vld [vmem:[%s294 + $0x58] sm:$0xff]
        %v371 = vld [vmem:[%s294 + $0x60] sm:$0xff]
        %v372 = vld [vmem:[%s294 + $0x68] sm:$0xff]
        %v373 = vld [vmem:[%s294 + $0x70] sm:$0xff]
        %v374 = vld [vmem:[%s294 + $0x78] sm:$0xff]
        %v375 = vld [vmem:[%s294 + $0x80] sm:$0xff]
        %v376 = vld [vmem:[%s294 + $0x88] sm:$0xff]
        %v377 = vld [vmem:[%s294 + $0x90] sm:$0xff]
        %v378 = vld [vmem:[%s294 + $0x98] sm:$0xff]
        %v379 = vld [vmem:[%s294 + $0xa0] sm:$0xff]
        %v380 = vld [vmem:[%s294 + $0xa8] sm:$0xff]
        %v381 = vld [vmem:[%s294 + $0xb0] sm:$0xff]
        %v382 = vld [vmem:[%s294 + $0xb8] sm:$0xff]
        %v383 = vld [vmem:[%s294 + $0xc0] sm:$0xff]
        %v384 = vld [vmem:[%s294 + $0xc8] sm:$0xff]
        %v385 = vld [vmem:[%s294 + $0xd0] sm:$0xff]
        %v386 = vld [vmem:[%s294 + $0xd8] sm:$0xff]
        %v387 = vld [vmem:[%s294 + $0xe0] sm:$0xff]
        %v388 = vld [vmem:[%s294 + $0xe8] sm:$0xff]
        %v389 = vld [vmem:[%s294 + $0xf0] sm:$0xff]
        %v390 = vld [vmem:[%s294 + $0xf8] sm:$0xff]
        %v391 = vld [vmem:[%s294 + $0x100] sm:$0xff]
        %v392 = vld [vmem:[%s294 + $0x108] sm:$0xff]
        %v393 = vld [vmem:[%s294 + $0x110] sm:$0xff]
        %v394 = vld [vmem:[%s294 + $0x118] sm:$0xff]
        %v395 = vld [vmem:[%s294 + $0x120] sm:$0xff]
        %v396 = vld [vmem:[%s294 + $0x128] sm:$0xff]
        %v397 = vld [vmem:[%s294 + $0x130] sm:$0xff]
        %v398 = vld [vmem:[%s294 + $0x138] sm:$0xff]
        %v399 = vld [vmem:[%s294 + $0x140] sm:$0xff]
        %v400 = vld [vmem:[%s294 + $0x148] sm:$0xff]
        %v401 = vld [vmem:[%s294 + $0x150] sm:$0xff]
        %v402 = vld [vmem:[%s294 + $0x158] sm:$0xff]
        %v403 = vld [vmem:[%s294 + $0x160] sm:$0xff]
        %v404 = vld [vmem:[%s294 + $0x168] sm:$0xff]
        %v405 = vld [vmem:[%s294 + $0x170] sm:$0xff]
        %v406 = vld [vmem:[%s294 + $0x178] sm:$0xff]
        %v407 = vld [vmem:[%s294 + $0x180] sm:$0xff]
        %v408 = vld [vmem:[%s294 + $0x188] sm:$0xff]
        %v409 = vld [vmem:[%s294 + $0x190] sm:$0xff]
        %v410 = vld [vmem:[%s294 + $0x198] sm:$0xff]
        %v411 = vld [vmem:[%s294 + $0x1a0] sm:$0xff]
        %v412 = vld [vmem:[%s294 + $0x1a8] sm:$0xff]
        %v413 = vld [vmem:[%s294 + $0x1b0] sm:$0xff]
        %v414 = vld [vmem:[%s294 + $0x1b8] sm:$0xff]
        %v415 = vld [vmem:[%s294 + $0x1c0] sm:$0xff]
        %v416 = vld [vmem:[%s294 + $0x1c8] sm:$0xff]
        %v417 = vld [vmem:[%s294 + $0x1d0] sm:$0xff]
        %v418 = vld [vmem:[%s294 + $0x1d8] sm:$0xff]
        %v419 = vld [vmem:[%s294 + $0x1e0] sm:$0xff]
        %v420 = vld [vmem:[%s294 + $0x1e8] sm:$0xff]
        %v421 = vld [vmem:[%s294 + $0x1f0] sm:$0xff]
        %v422 = vld [vmem:[%s294 + $0x1f8] sm:$0xff]
        %v439 = vunpack.c.l.b16 %v343
        %v440 = vunpack.c.h.b16 %v343
        %v441 = vunpack.c.l.b16 %v344
        %v442 = vunpack.c.h.b16 %v344
        %v443 = vunpack.c.l.b16 %v345
        %v444 = vunpack.c.h.b16 %v345
        %v445 = vunpack.c.l.b16 %v346
        %v446 = vunpack.c.h.b16 %v346
        %v447 = vunpack.c.l.b16 %v347
        %v448 = vunpack.c.h.b16 %v347
        %v449 = vunpack.c.l.b16 %v348
        %v450 = vunpack.c.h.b16 %v348
        %v451 = vunpack.c.l.b16 %v349
        %v452 = vunpack.c.h.b16 %v349
        %v453 = vunpack.c.l.b16 %v350
        %v454 = vunpack.c.h.b16 %v350
        %v455 = vunpack.c.l.b16 %v351
        %v456 = vunpack.c.h.b16 %v351
        %v457 = vunpack.c.l.b16 %v352
        %v458 = vunpack.c.h.b16 %v352
        %v459 = vunpack.c.l.b16 %v353
        %v460 = vunpack.c.h.b16 %v353
        %v461 = vunpack.c.l.b16 %v354
        %v462 = vunpack.c.h.b16 %v354
        %v463 = vunpack.c.l.b16 %v355
        %v464 = vunpack.c.h.b16 %v355
        %v465 = vunpack.c.l.b16 %v356
        %v466 = vunpack.c.h.b16 %v356
        %v467 = vunpack.c.l.b16 %v357
        %v468 = vunpack.c.h.b16 %v357
        %v469 = vunpack.c.l.b16 %v358
        %v470 = vunpack.c.h.b16 %v358
        %v471 = vpack.c.b16 %v441, %v439
        %v472 = vpack.c.b16 %v442, %v440
        %v473 = vpack.c.b16 %v445, %v443
        %v474 = vpack.c.b16 %v446, %v444
        %v475 = vpack.c.b16 %v449, %v447
        %v476 = vpack.c.b16 %v450, %v448
        %v477 = vpack.c.b16 %v453, %v451
        %v478 = vpack.c.b16 %v454, %v452
        %v479 = vpack.c.b16 %v457, %v455
        %v480 = vpack.c.b16 %v458, %v456
        %v481 = vpack.c.b16 %v461, %v459
        %v482 = vpack.c.b16 %v462, %v460
        %v483 = vpack.c.b16 %v465, %v463
        %v484 = vpack.c.b16 %v466, %v464
        %v485 = vpack.c.b16 %v469, %v467
        %v486 = vpack.c.b16 %v470, %v468
        %v567 = vunpack.c.l.b16 %v359
        %v568 = vunpack.c.h.b16 %v359
        %v569 = vunpack.c.l.b16 %v360
        %v570 = vunpack.c.h.b16 %v360
        %v571 = vunpack.c.l.b16 %v361
        %v572 = vunpack.c.h.b16 %v361
        %v573 = vunpack.c.l.b16 %v362
        %v574 = vunpack.c.h.b16 %v362
        %v575 = vunpack.c.l.b16 %v363
        %v576 = vunpack.c.h.b16 %v363
        %v577 = vunpack.c.l.b16 %v364
        %v578 = vunpack.c.h.b16 %v364
        %v579 = vunpack.c.l.b16 %v365
        %v580 = vunpack.c.h.b16 %v365
        %v581 = vunpack.c.l.b16 %v366
        %v582 = vunpack.c.h.b16 %v366
        %v583 = vunpack.c.l.b16 %v367
        %v584 = vunpack.c.h.b16 %v367
        %v585 = vunpack.c.l.b16 %v368
        %v586 = vunpack.c.h.b16 %v368
        %v587 = vunpack.c.l.b16 %v369
        %v588 = vunpack.c.h.b16 %v369
        %v589 = vunpack.c.l.b16 %v370
        %v590 = vunpack.c.h.b16 %v370
        %v591 = vunpack.c.l.b16 %v371
        %v592 = vunpack.c.h.b16 %v371
        %v593 = vunpack.c.l.b16 %v372
        %v594 = vunpack.c.h.b16 %v372
        %v595 = vunpack.c.l.b16 %v373
        %v596 = vunpack.c.h.b16 %v373
        %v597 = vunpack.c.l.b16 %v374
        %v598 = vunpack.c.h.b16 %v374
        %v599 = vunpack.c.l.b16 %v375
        %v600 = vunpack.c.h.b16 %v375
        %v601 = vunpack.c.l.b16 %v376
        %v602 = vunpack.c.h.b16 %v376
        %v603 = vunpack.c.l.b16 %v377
        %v604 = vunpack.c.h.b16 %v377
        %v605 = vunpack.c.l.b16 %v378
        %v606 = vunpack.c.h.b16 %v378
        %v607 = vunpack.c.l.b16 %v379
        %v608 = vunpack.c.h.b16 %v379
        %v609 = vunpack.c.l.b16 %v380
        %v610 = vunpack.c.h.b16 %v380
        %v611 = vunpack.c.l.b16 %v381
        %v612 = vunpack.c.h.b16 %v381
        %v613 = vunpack.c.l.b16 %v382
        %v614 = vunpack.c.h.b16 %v382
        %v615 = vunpack.c.l.b16 %v383
        %v616 = vunpack.c.h.b16 %v383
        %v617 = vunpack.c.l.b16 %v384
        %v618 = vunpack.c.h.b16 %v384
        %v619 = vunpack.c.l.b16 %v385
        %v620 = vunpack.c.h.b16 %v385
        %v621 = vunpack.c.l.b16 %v386
        %v622 = vunpack.c.h.b16 %v386
        %v623 = vunpack.c.l.b16 %v387
        %v624 = vunpack.c.h.b16 %v387
        %v625 = vunpack.c.l.b16 %v388
        %v626 = vunpack.c.h.b16 %v388
        %v627 = vunpack.c.l.b16 %v389
        %v628 = vunpack.c.h.b16 %v389
        %v629 = vunpack.c.l.b16 %v390
        %v630 = vunpack.c.h.b16 %v390
        %v631 = vunpack.c.l.b16 %v391
        %v632 = vunpack.c.h.b16 %v391
        %v633 = vunpack.c.l.b16 %v392
        %v634 = vunpack.c.h.b16 %v392
        %v635 = vunpack.c.l.b16 %v393
        %v636 = vunpack.c.h.b16 %v393
        %v637 = vunpack.c.l.b16 %v394
        %v638 = vunpack.c.h.b16 %v394
        %v639 = vunpack.c.l.b16 %v395
        %v640 = vunpack.c.h.b16 %v395
        %v641 = vunpack.c.l.b16 %v396
        %v642 = vunpack.c.h.b16 %v396
        %v643 = vunpack.c.l.b16 %v397
        %v644 = vunpack.c.h.b16 %v397
        %v645 = vunpack.c.l.b16 %v398
        %v646 = vunpack.c.h.b16 %v398
        %v647 = vunpack.c.l.b16 %v399
        %v648 = vunpack.c.h.b16 %v399
        %v649 = vunpack.c.l.b16 %v400
        %v650 = vunpack.c.h.b16 %v400
        %v651 = vunpack.c.l.b16 %v401
        %v652 = vunpack.c.h.b16 %v401
        %v653 = vunpack.c.l.b16 %v402
        %v654 = vunpack.c.h.b16 %v402
        %v655 = vunpack.c.l.b16 %v403
        %v656 = vunpack.c.h.b16 %v403
        %v657 = vunpack.c.l.b16 %v404
        %v658 = vunpack.c.h.b16 %v404
        %v659 = vunpack.c.l.b16 %v405
        %v660 = vunpack.c.h.b16 %v405
        %v661 = vunpack.c.l.b16 %v406
        %v662 = vunpack.c.h.b16 %v406
        %v663 = vunpack.c.l.b16 %v407
        %v664 = vunpack.c.h.b16 %v407
        %v665 = vunpack.c.l.b16 %v408
        %v666 = vunpack.c.h.b16 %v408
        %v667 = vunpack.c.l.b16 %v409
        %v668 = vunpack.c.h.b16 %v409
        %v669 = vunpack.c.l.b16 %v410
        %v670 = vunpack.c.h.b16 %v410
        %v671 = vunpack.c.l.b16 %v411
        %v672 = vunpack.c.h.b16 %v411
        %v673 = vunpack.c.l.b16 %v412
        %v674 = vunpack.c.h.b16 %v412
        %v675 = vunpack.c.l.b16 %v413
        %v676 = vunpack.c.h.b16 %v413
        %v677 = vunpack.c.l.b16 %v414
        %v678 = vunpack.c.h.b16 %v414
        %v679 = vunpack.c.l.b16 %v415
        %v680 = vunpack.c.h.b16 %v415
        %v681 = vunpack.c.l.b16 %v416
        %v682 = vunpack.c.h.b16 %v416
        %v683 = vunpack.c.l.b16 %v417
        %v684 = vunpack.c.h.b16 %v417
        %v685 = vunpack.c.l.b16 %v418
        %v686 = vunpack.c.h.b16 %v418
        %v687 = vunpack.c.l.b16 %v419
        %v688 = vunpack.c.h.b16 %v419
        %v689 = vunpack.c.l.b16 %v420
        %v690 = vunpack.c.h.b16 %v420
        %v691 = vunpack.c.l.b16 %v421
        %v692 = vunpack.c.h.b16 %v421
        %v693 = vunpack.c.l.b16 %v422
        %v694 = vunpack.c.h.b16 %v422
        %v695 = vpack.c.b16 %v571, %v567
        %v696 = vpack.c.b16 %v572, %v568
        %v697 = vpack.c.b16 %v573, %v569
        %v698 = vpack.c.b16 %v574, %v570
        %v699 = vpack.c.b16 %v579, %v575
        %v700 = vpack.c.b16 %v580, %v576
        %v701 = vpack.c.b16 %v581, %v577
        %v702 = vpack.c.b16 %v582, %v578
        %v703 = vpack.c.b16 %v587, %v583
        %v704 = vpack.c.b16 %v588, %v584
        %v705 = vpack.c.b16 %v589, %v585
        %v706 = vpack.c.b16 %v590, %v586
        %v707 = vpack.c.b16 %v595, %v591
        %v708 = vpack.c.b16 %v596, %v592
        %v709 = vpack.c.b16 %v597, %v593
        %v710 = vpack.c.b16 %v598, %v594
        %v711 = vpack.c.b16 %v603, %v599
        %v712 = vpack.c.b16 %v604, %v600
        %v713 = vpack.c.b16 %v605, %v601
        %v714 = vpack.c.b16 %v606, %v602
        %v715 = vpack.c.b16 %v611, %v607
        %v716 = vpack.c.b16 %v612, %v608
        %v717 = vpack.c.b16 %v613, %v609
        %v718 = vpack.c.b16 %v614, %v610
        %v719 = vpack.c.b16 %v619, %v615
        %v720 = vpack.c.b16 %v620, %v616
        %v721 = vpack.c.b16 %v621, %v617
        %v722 = vpack.c.b16 %v622, %v618
        %v723 = vpack.c.b16 %v627, %v623
        %v724 = vpack.c.b16 %v628, %v624
        %v725 = vpack.c.b16 %v629, %v625
        %v726 = vpack.c.b16 %v630, %v626
        %v727 = vpack.c.b16 %v635, %v631
        %v728 = vpack.c.b16 %v636, %v632
        %v729 = vpack.c.b16 %v637, %v633
        %v730 = vpack.c.b16 %v638, %v634
        %v731 = vpack.c.b16 %v643, %v639
        %v732 = vpack.c.b16 %v644, %v640
        %v733 = vpack.c.b16 %v645, %v641
        %v734 = vpack.c.b16 %v646, %v642
        %v735 = vpack.c.b16 %v651, %v647
        %v736 = vpack.c.b16 %v652, %v648
        %v737 = vpack.c.b16 %v653, %v649
        %v738 = vpack.c.b16 %v654, %v650
        %v739 = vpack.c.b16 %v659, %v655
        %v740 = vpack.c.b16 %v660, %v656
        %v741 = vpack.c.b16 %v661, %v657
        %v742 = vpack.c.b16 %v662, %v658
        %v743 = vpack.c.b16 %v667, %v663
        %v744 = vpack.c.b16 %v668, %v664
        %v745 = vpack.c.b16 %v669, %v665
        %v746 = vpack.c.b16 %v670, %v666
        %v747 = vpack.c.b16 %v675, %v671
        %v748 = vpack.c.b16 %v676, %v672
        %v749 = vpack.c.b16 %v677, %v673
        %v750 = vpack.c.b16 %v678, %v674
        %v751 = vpack.c.b16 %v683, %v679
        %v752 = vpack.c.b16 %v684, %v680
        %v753 = vpack.c.b16 %v685, %v681
        %v754 = vpack.c.b16 %v686, %v682
        %v755 = vpack.c.b16 %v691, %v687
        %v756 = vpack.c.b16 %v692, %v688
        %v757 = vpack.c.b16 %v693, %v689
        %v758 = vpack.c.b16 %v694, %v690
        %823 = vmatprep.subr.bf16.mxu0 %v724
        %824 = vmatpush1.bf16.msra.mxu0 %v723
        %825 = vmatprep.subr.bf16.mxu0 %v720
        %826 = vmatpush1.bf16.msra.mxu0 %v719
        %827 = vmatprep.subr.bf16.mxu0 %v716
        %828 = vmatpush1.bf16.msra.mxu0 %v715
        %829 = vmatprep.subr.bf16.mxu0 %v712
        %830 = vmatpush1.bf16.msra.mxu0 %v711
        %831 = vmatprep.subr.bf16.mxu0 %v708
        %832 = vmatpush1.bf16.msra.mxu0 %v707
        %833 = vmatprep.subr.bf16.mxu0 %v704
        %834 = vmatpush1.bf16.msra.mxu0 %v703
        %835 = vmatprep.subr.bf16.mxu0 %v700
        %836 = vmatpush1.bf16.msra.mxu0 %v699
        %837 = vmatprep.subr.bf16.mxu0 %v696
        %838 = vmatpush1.bf16.msra.mxu0 %v695
        %839 = vmatprep.subr.bf16.mxu0 %v756
        %840 = vmatpush2.bf16.msra.mxu0 %v755
        %841 = vmatprep.subr.bf16.mxu0 %v752
        %842 = vmatpush2.bf16.msra.mxu0 %v751
        %843 = vmatprep.subr.bf16.mxu0 %v748
        %844 = vmatpush2.bf16.msra.mxu0 %v747
        %845 = vmatprep.subr.bf16.mxu0 %v744
        %846 = vmatpush2.bf16.msra.mxu0 %v743
        %847 = vmatprep.subr.bf16.mxu0 %v740
        %848 = vmatpush2.bf16.msra.mxu0 %v739
        %849 = vmatprep.subr.bf16.mxu0 %v736
        %850 = vmatpush2.bf16.msra.mxu0 %v735
        %851 = vmatprep.subr.bf16.mxu0 %v732
        %852 = vmatpush2.bf16.msra.mxu0 %v731
        %853 = vmatprep.subr.bf16.mxu0 %v728
        %854 = vmatpush2.bf16.msra.mxu0 %v727
        %855 = vmatprep.mubr.bf16.mxu0 %v472
        %856 = vmatmul.mubr.bf16.gmra.mxu0 %v471
        %v857 = vpop.f32.mrf.mxu0
        %v858 = vadd.f32 0.0, %v857
        %v859 = vpop.f32.mrf.mxu0
        %v860 = vadd.f32 0.0, %v859
        %v861 = vpop.f32.mrf.mxu0
        %v862 = vadd.f32 0.0, %v861
        %v863 = vpop.f32.mrf.mxu0
        %v864 = vadd.f32 0.0, %v863
        %865 = vmatprep.mubr.bf16.mxu0 %v474
        %866 = vmatmul.mubr.bf16.gmra.mxu0 %v473
        %v867 = vpop.f32.mrf.mxu0
        %v868 = vadd.f32 0.0, %v867
        %v869 = vpop.f32.mrf.mxu0
        %v870 = vadd.f32 0.0, %v869
        %v871 = vpop.f32.mrf.mxu0
        %v872 = vadd.f32 0.0, %v871
        %v873 = vpop.f32.mrf.mxu0
        %v874 = vadd.f32 0.0, %v873
        %875 = vmatprep.mubr.bf16.mxu0 %v476
        %876 = vmatmul.mubr.bf16.gmra.mxu0 %v475
        %v877 = vpop.f32.mrf.mxu0
        %v878 = vadd.f32 0.0, %v877
        %v879 = vpop.f32.mrf.mxu0
        %v880 = vadd.f32 0.0, %v879
        %v881 = vpop.f32.mrf.mxu0
        %v882 = vadd.f32 0.0, %v881
        %v883 = vpop.f32.mrf.mxu0
        %v884 = vadd.f32 0.0, %v883
        %885 = vmatprep.mubr.bf16.mxu0 %v478
        %886 = vmatmul.mubr.bf16.gmra.mxu0 %v477
        %v887 = vpop.f32.mrf.mxu0
        %v888 = vadd.f32 0.0, %v887
        %v889 = vpop.f32.mrf.mxu0
        %v890 = vadd.f32 0.0, %v889
        %v891 = vpop.f32.mrf.mxu0
        %v892 = vadd.f32 0.0, %v891
        %v893 = vpop.f32.mrf.mxu0
        %v894 = vadd.f32 0.0, %v893
        %895 = vmatprep.mubr.bf16.mxu0 %v480
        %896 = vmatmul.mubr.bf16.gmra.mxu0 %v479
        %v897 = vpop.f32.mrf.mxu0
        %v898 = vadd.f32 0.0, %v897
        %v899 = vpop.f32.mrf.mxu0
        %v900 = vadd.f32 0.0, %v899
        %v901 = vpop.f32.mrf.mxu0
        %v902 = vadd.f32 0.0, %v901
        %v903 = vpop.f32.mrf.mxu0
        %v904 = vadd.f32 0.0, %v903
        %905 = vmatprep.mubr.bf16.mxu0 %v482
        %906 = vmatmul.mubr.bf16.gmra.mxu0 %v481
        %v907 = vpop.f32.mrf.mxu0
        %v908 = vadd.f32 0.0, %v907
        %v909 = vpop.f32.mrf.mxu0
        %v910 = vadd.f32 0.0, %v909
        %v911 = vpop.f32.mrf.mxu0
        %v912 = vadd.f32 0.0, %v911
        %v913 = vpop.f32.mrf.mxu0
        %v914 = vadd.f32 0.0, %v913
        %915 = vmatprep.mubr.bf16.mxu0 %v484
        %916 = vmatmul.mubr.bf16.gmra.mxu0 %v483
        %v917 = vpop.f32.mrf.mxu0
        %v918 = vadd.f32 0.0, %v917
        %v919 = vpop.f32.mrf.mxu0
        %v920 = vadd.f32 0.0, %v919
        %v921 = vpop.f32.mrf.mxu0
        %v922 = vadd.f32 0.0, %v921
        %v923 = vpop.f32.mrf.mxu0
        %v924 = vadd.f32 0.0, %v923
        %925 = vmatprep.mubr.bf16.mxu0 %v486
        %926 = vmatmul.mubr.bf16.gmra.mxu0 %v485
        %v927 = vpop.f32.mrf.mxu0
        %v928 = vadd.f32 0.0, %v927
        %v929 = vpop.f32.mrf.mxu0
        %v930 = vadd.f32 0.0, %v929
        %v931 = vpop.f32.mrf.mxu0
        %v932 = vadd.f32 0.0, %v931
        %v933 = vpop.f32.mrf.mxu0
        %v934 = vadd.f32 0.0, %v933
        %935 = vdwg.mxu0
        %936 = vmatprep.subr.bf16.mxu0 %v726
        %937 = vmatpush1.bf16.msra.mxu0 %v725
        %938 = vmatprep.subr.bf16.mxu0 %v722
        %939 = vmatpush1.bf16.msra.mxu0 %v721
        %940 = vmatprep.subr.bf16.mxu0 %v718
        %941 = vmatpush1.bf16.msra.mxu0 %v717
        %942 = vmatprep.subr.bf16.mxu0 %v714
        %943 = vmatpush1.bf16.msra.mxu0 %v713
        %944 = vmatprep.subr.bf16.mxu0 %v710
        %945 = vmatpush1.bf16.msra.mxu0 %v709
        %946 = vmatprep.subr.bf16.mxu0 %v706
        %947 = vmatpush1.bf16.msra.mxu0 %v705
        %948 = vmatprep.subr.bf16.mxu0 %v702
        %949 = vmatpush1.bf16.msra.mxu0 %v701
        %950 = vmatprep.subr.bf16.mxu0 %v698
        %951 = vmatpush1.bf16.msra.mxu0 %v697
        %952 = vmatprep.subr.bf16.mxu0 %v758
        %953 = vmatpush2.bf16.msra.mxu0 %v757
        %954 = vmatprep.subr.bf16.mxu0 %v754
        %955 = vmatpush2.bf16.msra.mxu0 %v753
        %956 = vmatprep.subr.bf16.mxu0 %v750
        %957 = vmatpush2.bf16.msra.mxu0 %v749
        %958 = vmatprep.subr.bf16.mxu0 %v746
        %959 = vmatpush2.bf16.msra.mxu0 %v745
        %960 = vmatprep.subr.bf16.mxu0 %v742
        %961 = vmatpush2.bf16.msra.mxu0 %v741
        %962 = vmatprep.subr.bf16.mxu0 %v738
        %963 = vmatpush2.bf16.msra.mxu0 %v737
        %964 = vmatprep.subr.bf16.mxu0 %v734
        %965 = vmatpush2.bf16.msra.mxu0 %v733
        %966 = vmatprep.subr.bf16.mxu0 %v730
        %967 = vmatpush2.bf16.msra.mxu0 %v729
        %968 = vmatprep.mubr.bf16.mxu0 %v472
        %969 = vmatmul.mubr.bf16.gmra.mxu0 %v471
        %v970 = vpop.f32.mrf.mxu0
        %v971 = vadd.f32 0.0, %v970
        %v972 = vpop.f32.mrf.mxu0
        %v973 = vadd.f32 0.0, %v972
        %v974 = vpop.f32.mrf.mxu0
        %v975 = vadd.f32 0.0, %v974
        %v976 = vpop.f32.mrf.mxu0
        %v977 = vadd.f32 0.0, %v976
        %978 = vmatprep.mubr.bf16.mxu0 %v474
        %979 = vmatmul.mubr.bf16.gmra.mxu0 %v473
        %v980 = vpop.f32.mrf.mxu0
        %v981 = vadd.f32 0.0, %v980
        %v982 = vpop.f32.mrf.mxu0
        %v983 = vadd.f32 0.0, %v982
        %v984 = vpop.f32.mrf.mxu0
        %v985 = vadd.f32 0.0, %v984
        %v986 = vpop.f32.mrf.mxu0
        %v987 = vadd.f32 0.0, %v986
        %988 = vmatprep.mubr.bf16.mxu0 %v476
        %989 = vmatmul.mubr.bf16.gmra.mxu0 %v475
        %v990 = vpop.f32.mrf.mxu0
        %v991 = vadd.f32 0.0, %v990
        %v992 = vpop.f32.mrf.mxu0
        %v993 = vadd.f32 0.0, %v992
        %v994 = vpop.f32.mrf.mxu0
        %v995 = vadd.f32 0.0, %v994
        %v996 = vpop.f32.mrf.mxu0
        %v997 = vadd.f32 0.0, %v996
        %998 = vmatprep.mubr.bf16.mxu0 %v478
        %999 = vmatmul.mubr.bf16.gmra.mxu0 %v477
        %v1000 = vpop.f32.mrf.mxu0
        %v1001 = vadd.f32 0.0, %v1000
        %v1002 = vpop.f32.mrf.mxu0
        %v1003 = vadd.f32 0.0, %v1002
        %v1004 = vpop.f32.mrf.mxu0
        %v1005 = vadd.f32 0.0, %v1004
        %v1006 = vpop.f32.mrf.mxu0
        %v1007 = vadd.f32 0.0, %v1006
        %1008 = vmatprep.mubr.bf16.mxu0 %v480
        %1009 = vmatmul.mubr.bf16.gmra.mxu0 %v479
        %v1010 = vpop.f32.mrf.mxu0
        %v1011 = vadd.f32 0.0, %v1010
        %v1012 = vpop.f32.mrf.mxu0
        %v1013 = vadd.f32 0.0, %v1012
        %v1014 = vpop.f32.mrf.mxu0
        %v1015 = vadd.f32 0.0, %v1014
        %v1016 = vpop.f32.mrf.mxu0
        %v1017 = vadd.f32 0.0, %v1016
        %1018 = vmatprep.mubr.bf16.mxu0 %v482
        %1019 = vmatmul.mubr.bf16.gmra.mxu0 %v481
        %v1020 = vpop.f32.mrf.mxu0
        %v1021 = vadd.f32 0.0, %v1020
        %v1022 = vpop.f32.mrf.mxu0
        %v1023 = vadd.f32 0.0, %v1022
        %v1024 = vpop.f32.mrf.mxu0
        %v1025 = vadd.f32 0.0, %v1024
        %v1026 = vpop.f32.mrf.mxu0
        %v1027 = vadd.f32 0.0, %v1026
        %1028 = vmatprep.mubr.bf16.mxu0 %v484
        %1029 = vmatmul.mubr.bf16.gmra.mxu0 %v483
        %v1030 = vpop.f32.mrf.mxu0
        %v1031 = vadd.f32 0.0, %v1030
        %v1032 = vpop.f32.mrf.mxu0
        %v1033 = vadd.f32 0.0, %v1032
        %v1034 = vpop.f32.mrf.mxu0
        %v1035 = vadd.f32 0.0, %v1034
        %v1036 = vpop.f32.mrf.mxu0
        %v1037 = vadd.f32 0.0, %v1036
        %1038 = vmatprep.mubr.bf16.mxu0 %v486
        %1039 = vmatmul.mubr.bf16.gmra.mxu0 %v485
        %v1040 = vpop.f32.mrf.mxu0
        %v1041 = vadd.f32 0.0, %v1040
        %v1042 = vpop.f32.mrf.mxu0
        %v1043 = vadd.f32 0.0, %v1042
        %v1044 = vpop.f32.mrf.mxu0
        %v1045 = vadd.f32 0.0, %v1044
        %v1046 = vpop.f32.mrf.mxu0
        %v1047 = vadd.f32 0.0, %v1046
        %1048 = vdwg.mxu0
        %v1049 = vpack.c.bf16 %v862, %v858
        %v1050 = vpack.c.bf16 %v864, %v860
        %v1051 = vpack.c.bf16 %v975, %v971
        %v1052 = vpack.c.bf16 %v977, %v973
        %v1053 = vpack.c.bf16 %v872, %v868
        %v1054 = vpack.c.bf16 %v874, %v870
        %v1055 = vpack.c.bf16 %v985, %v981
        %v1056 = vpack.c.bf16 %v987, %v983
        %v1057 = vpack.c.bf16 %v882, %v878
        %v1058 = vpack.c.bf16 %v884, %v880
        %v1059 = vpack.c.bf16 %v995, %v991
        %v1060 = vpack.c.bf16 %v997, %v993
        %v1061 = vpack.c.bf16 %v892, %v888
        %v1062 = vpack.c.bf16 %v894, %v890
        %v1063 = vpack.c.bf16 %v1005, %v1001
        %v1064 = vpack.c.bf16 %v1007, %v1003
        %v1065 = vpack.c.bf16 %v902, %v898
        %v1066 = vpack.c.bf16 %v904, %v900
        %v1067 = vpack.c.bf16 %v1015, %v1011
        %v1068 = vpack.c.bf16 %v1017, %v1013
        %v1069 = vpack.c.bf16 %v912, %v908
        %v1070 = vpack.c.bf16 %v914, %v910
        %v1071 = vpack.c.bf16 %v1025, %v1021
        %v1072 = vpack.c.bf16 %v1027, %v1023
        %v1073 = vpack.c.bf16 %v922, %v918
        %v1074 = vpack.c.bf16 %v924, %v920
        %v1075 = vpack.c.bf16 %v1035, %v1031
        %v1076 = vpack.c.bf16 %v1037, %v1033
        %v1077 = vpack.c.bf16 %v932, %v928
        %v1078 = vpack.c.bf16 %v934, %v930
        %v1079 = vpack.c.bf16 %v1045, %v1041
        %v1080 = vpack.c.bf16 %v1047, %v1043
        %v1113 = vunpack.c.l.b16 %v1049
        %v1114 = vunpack.c.l.b16 %v1050
        %v1115 = vunpack.c.l.b16 %v1051
        %v1116 = vunpack.c.l.b16 %v1052
        %v1117 = vunpack.c.h.b16 %v1049
        %v1118 = vunpack.c.h.b16 %v1050
        %v1119 = vunpack.c.h.b16 %v1051
        %v1120 = vunpack.c.h.b16 %v1052
        %v1121 = vunpack.c.l.b16 %v1053
        %v1122 = vunpack.c.l.b16 %v1054
        %v1123 = vunpack.c.l.b16 %v1055
        %v1124 = vunpack.c.l.b16 %v1056
        %v1125 = vunpack.c.h.b16 %v1053
        %v1126 = vunpack.c.h.b16 %v1054
        %v1127 = vunpack.c.h.b16 %v1055
        %v1128 = vunpack.c.h.b16 %v1056
        %v1129 = vunpack.c.l.b16 %v1057
        %v1130 = vunpack.c.l.b16 %v1058
        %v1131 = vunpack.c.l.b16 %v1059
        %v1132 = vunpack.c.l.b16 %v1060
        %v1133 = vunpack.c.h.b16 %v1057
        %v1134 = vunpack.c.h.b16 %v1058
        %v1135 = vunpack.c.h.b16 %v1059
        %v1136 = vunpack.c.h.b16 %v1060
        %v1137 = vunpack.c.l.b16 %v1061
        %v1138 = vunpack.c.l.b16 %v1062
        %v1139 = vunpack.c.l.b16 %v1063
        %v1140 = vunpack.c.l.b16 %v1064
        %v1141 = vunpack.c.h.b16 %v1061
        %v1142 = vunpack.c.h.b16 %v1062
        %v1143 = vunpack.c.h.b16 %v1063
        %v1144 = vunpack.c.h.b16 %v1064
        %v1145 = vunpack.c.l.b16 %v1065
        %v1146 = vunpack.c.l.b16 %v1066
        %v1147 = vunpack.c.l.b16 %v1067
        %v1148 = vunpack.c.l.b16 %v1068
        %v1149 = vunpack.c.h.b16 %v1065
        %v1150 = vunpack.c.h.b16 %v1066
        %v1151 = vunpack.c.h.b16 %v1067
        %v1152 = vunpack.c.h.b16 %v1068
        %v1153 = vunpack.c.l.b16 %v1069
        %v1154 = vunpack.c.l.b16 %v1070
        %v1155 = vunpack.c.l.b16 %v1071
        %v1156 = vunpack.c.l.b16 %v1072
        %v1157 = vunpack.c.h.b16 %v1069
        %v1158 = vunpack.c.h.b16 %v1070
        %v1159 = vunpack.c.h.b16 %v1071
        %v1160 = vunpack.c.h.b16 %v1072
        %v1161 = vunpack.c.l.b16 %v1073
        %v1162 = vunpack.c.l.b16 %v1074
        %v1163 = vunpack.c.l.b16 %v1075
        %v1164 = vunpack.c.l.b16 %v1076
        %v1165 = vunpack.c.h.b16 %v1073
        %v1166 = vunpack.c.h.b16 %v1074
        %v1167 = vunpack.c.h.b16 %v1075
        %v1168 = vunpack.c.h.b16 %v1076
        %v1169 = vunpack.c.l.b16 %v1077
        %v1170 = vunpack.c.l.b16 %v1078
        %v1171 = vunpack.c.l.b16 %v1079
        %v1172 = vunpack.c.l.b16 %v1080
        %v1173 = vunpack.c.h.b16 %v1077
        %v1174 = vunpack.c.h.b16 %v1078
        %v1175 = vunpack.c.h.b16 %v1079
        %v1176 = vunpack.c.h.b16 %v1080
        %v1177 = vpack.c.b16 %v1114, %v1113
        %v1178 = vpack.c.b16 %v1116, %v1115
        %v1179 = vpack.c.b16 %v1118, %v1117
        %v1180 = vpack.c.b16 %v1120, %v1119
        %v1181 = vpack.c.b16 %v1122, %v1121
        %v1182 = vpack.c.b16 %v1124, %v1123
        %v1183 = vpack.c.b16 %v1126, %v1125
        %v1184 = vpack.c.b16 %v1128, %v1127
        %v1185 = vpack.c.b16 %v1130, %v1129
        %v1186 = vpack.c.b16 %v1132, %v1131
        %v1187 = vpack.c.b16 %v1134, %v1133
        %v1188 = vpack.c.b16 %v1136, %v1135
        %v1189 = vpack.c.b16 %v1138, %v1137
        %v1190 = vpack.c.b16 %v1140, %v1139
        %v1191 = vpack.c.b16 %v1142, %v1141
        %v1192 = vpack.c.b16 %v1144, %v1143
        %v1193 = vpack.c.b16 %v1146, %v1145
        %v1194 = vpack.c.b16 %v1148, %v1147
        %v1195 = vpack.c.b16 %v1150, %v1149
        %v1196 = vpack.c.b16 %v1152, %v1151
        %v1197 = vpack.c.b16 %v1154, %v1153
        %v1198 = vpack.c.b16 %v1156, %v1155
        %v1199 = vpack.c.b16 %v1158, %v1157
        %v1200 = vpack.c.b16 %v1160, %v1159
        %v1201 = vpack.c.b16 %v1162, %v1161
        %v1202 = vpack.c.b16 %v1164, %v1163
        %v1203 = vpack.c.b16 %v1166, %v1165
        %v1204 = vpack.c.b16 %v1168, %v1167
        %v1205 = vpack.c.b16 %v1170, %v1169
        %v1206 = vpack.c.b16 %v1172, %v1171
        %v1207 = vpack.c.b16 %v1174, %v1173
        %v1208 = vpack.c.b16 %v1176, %v1175
        %1241 = vst [vmem:[#allocation2] sm:$0xff] %v1177
        %1242 = vst [vmem:[#allocation2 + $0x8] sm:$0xff] %v1178
        %1243 = vst [vmem:[#allocation2 + $0x10] sm:$0xff] %v1179
        %1244 = vst [vmem:[#allocation2 + $0x18] sm:$0xff] %v1180
        %1245 = vst [vmem:[#allocation2 + $0x20] sm:$0xff] %v1181
        %1246 = vst [vmem:[#allocation2 + $0x28] sm:$0xff] %v1182
        %1247 = vst [vmem:[#allocation2 + $0x30] sm:$0xff] %v1183
        %1248 = vst [vmem:[#allocation2 + $0x38] sm:$0xff] %v1184
        %1249 = vst [vmem:[#allocation2 + $0x40] sm:$0xff] %v1185
        %1250 = vst [vmem:[#allocation2 + $0x48] sm:$0xff] %v1186
        %1251 = vst [vmem:[#allocation2 + $0x50] sm:$0xff] %v1187
        %1252 = vst [vmem:[#allocation2 + $0x58] sm:$0xff] %v1188
        %1253 = vst [vmem:[#allocation2 + $0x60] sm:$0xff] %v1189
        %1254 = vst [vmem:[#allocation2 + $0x68] sm:$0xff] %v1190
        %1255 = vst [vmem:[#allocation2 + $0x70] sm:$0xff] %v1191
        %1256 = vst [vmem:[#allocation2 + $0x78] sm:$0xff] %v1192
        %1257 = vst [vmem:[#allocation2 + $0x80] sm:$0xff] %v1193
        %1258 = vst [vmem:[#allocation2 + $0x88] sm:$0xff] %v1194
        %1259 = vst [vmem:[#allocation2 + $0x90] sm:$0xff] %v1195
        %1260 = vst [vmem:[#allocation2 + $0x98] sm:$0xff] %v1196
        %1261 = vst [vmem:[#allocation2 + $0xa0] sm:$0xff] %v1197
        %1262 = vst [vmem:[#allocation2 + $0xa8] sm:$0xff] %v1198
        %1263 = vst [vmem:[#allocation2 + $0xb0] sm:$0xff] %v1199
        %1264 = vst [vmem:[#allocation2 + $0xb8] sm:$0xff] %v1200
        %1265 = vst [vmem:[#allocation2 + $0xc0] sm:$0xff] %v1201
        %1266 = vst [vmem:[#allocation2 + $0xc8] sm:$0xff] %v1202
        %1267 = vst [vmem:[#allocation2 + $0xd0] sm:$0xff] %v1203
        %1268 = vst [vmem:[#allocation2 + $0xd8] sm:$0xff] %v1204
        %1269 = vst [vmem:[#allocation2 + $0xe0] sm:$0xff] %v1205
        %1270 = vst [vmem:[#allocation2 + $0xe8] sm:$0xff] %v1206
        %1271 = vst [vmem:[#allocation2 + $0xf0] sm:$0xff] %v1207
        %1272 = vst [vmem:[#allocation2 + $0xf8] sm:$0xff] %v1208
        %v1273 = vld [vmem:[#allocation9] sm:$0xff]
        %v1274 = vld [vmem:[#allocation9 + $0x8] sm:$0xff]
        %v1275 = vld [vmem:[#allocation9 + $0x10] sm:$0xff]
        %v1276 = vld [vmem:[#allocation9 + $0x18] sm:$0xff]
        %v1277 = vld [vmem:[#allocation9 + $0x20] sm:$0xff]
        %v1278 = vld [vmem:[#allocation9 + $0x28] sm:$0xff]
        %v1279 = vld [vmem:[#allocation9 + $0x30] sm:$0xff]
        %v1280 = vld [vmem:[#allocation9 + $0x38] sm:$0xff]
        %v1281 = vld [vmem:[#allocation9 + $0x40] sm:$0xff]
        %v1282 = vld [vmem:[#allocation9 + $0x48] sm:$0xff]
        %v1283 = vld [vmem:[#allocation9 + $0x50] sm:$0xff]
        %v1284 = vld [vmem:[#allocation9 + $0x58] sm:$0xff]
        %v1285 = vld [vmem:[#allocation9 + $0x60] sm:$0xff]
        %v1286 = vld [vmem:[#allocation9 + $0x68] sm:$0xff]
        %v1287 = vld [vmem:[#allocation9 + $0x70] sm:$0xff]
        %v1288 = vld [vmem:[#allocation9 + $0x78] sm:$0xff]
        %v1289 = vld [vmem:[#allocation11] sm:$0xff]
        %v1290 = vld [vmem:[#allocation11 + $0x8] sm:$0xff]
        %v1291 = vld [vmem:[#allocation11 + $0x10] sm:$0xff]
        %v1292 = vld [vmem:[#allocation11 + $0x18] sm:$0xff]
        %v1293 = vld [vmem:[#allocation11 + $0x20] sm:$0xff]
        %v1294 = vld [vmem:[#allocation11 + $0x28] sm:$0xff]
        %v1295 = vld [vmem:[#allocation11 + $0x30] sm:$0xff]
        %v1296 = vld [vmem:[#allocation11 + $0x38] sm:$0xff]
        %v1297 = vld [vmem:[#allocation11 + $0x40] sm:$0xff]
        %v1298 = vld [vmem:[#allocation11 + $0x48] sm:$0xff]
        %v1299 = vld [vmem:[#allocation11 + $0x50] sm:$0xff]
        %v1300 = vld [vmem:[#allocation11 + $0x58] sm:$0xff]
        %v1301 = vld [vmem:[#allocation11 + $0x60] sm:$0xff]
        %v1302 = vld [vmem:[#allocation11 + $0x68] sm:$0xff]
        %v1303 = vld [vmem:[#allocation11 + $0x70] sm:$0xff]
        %v1304 = vld [vmem:[#allocation11 + $0x78] sm:$0xff]
        %v1305 = vld [vmem:[#allocation2 + $0x8] sm:$0xf]
        %v1306 = vld [vmem:[#allocation2 + $0x18] sm:$0xf]
        %v1307 = vld [vmem:[#allocation2 + $0x28] sm:$0xf]
        %v1308 = vld [vmem:[#allocation2 + $0x38] sm:$0xf]
        %v1309 = vld [vmem:[#allocation2 + $0x48] sm:$0xf]
        %v1310 = vld [vmem:[#allocation2 + $0x58] sm:$0xf]
        %v1311 = vld [vmem:[#allocation2 + $0x68] sm:$0xf]
        %v1312 = vld [vmem:[#allocation2 + $0x78] sm:$0xf]
        %v1313 = vld [vmem:[#allocation2 + $0x88] sm:$0xf]
        %v1314 = vld [vmem:[#allocation2 + $0x98] sm:$0xf]
        %v1315 = vld [vmem:[#allocation2 + $0xa8] sm:$0xf]
        %v1316 = vld [vmem:[#allocation2 + $0xb8] sm:$0xf]
        %v1317 = vld [vmem:[#allocation2 + $0xc8] sm:$0xf]
        %v1318 = vld [vmem:[#allocation2 + $0xd8] sm:$0xf]
        %v1319 = vld [vmem:[#allocation2 + $0xe8] sm:$0xf]
        %v1320 = vld [vmem:[#allocation2 + $0xf8] sm:$0xf]
        %v1321 = vunpack.c.l.bf16 %v1305
        %v1322 = vunpack.c.l.bf16 %v1306
        %v1323 = vunpack.c.l.bf16 %v1307
        %v1324 = vunpack.c.l.bf16 %v1308
        %v1325 = vunpack.c.l.bf16 %v1309
        %v1326 = vunpack.c.l.bf16 %v1310
        %v1327 = vunpack.c.l.bf16 %v1311
        %v1328 = vunpack.c.l.bf16 %v1312
        %v1329 = vunpack.c.l.bf16 %v1313
        %v1330 = vunpack.c.l.bf16 %v1314
        %v1331 = vunpack.c.l.bf16 %v1315
        %v1332 = vunpack.c.l.bf16 %v1316
        %v1333 = vunpack.c.l.bf16 %v1317
        %v1334 = vunpack.c.l.bf16 %v1318
        %v1335 = vunpack.c.l.bf16 %v1319
        %v1336 = vunpack.c.l.bf16 %v1320
        %v1337 = vmul.f32 %v1321, %v1273
        %v1338 = vmul.f32 %v1322, %v1274
        %v1339 = vmul.f32 %v1323, %v1275
        %v1340 = vmul.f32 %v1324, %v1276
        %v1341 = vmul.f32 %v1325, %v1277
        %v1342 = vmul.f32 %v1326, %v1278
        %v1343 = vmul.f32 %v1327, %v1279
        %v1344 = vmul.f32 %v1328, %v1280
        %v1345 = vmul.f32 %v1329, %v1281
        %v1346 = vmul.f32 %v1330, %v1282
        %v1347 = vmul.f32 %v1331, %v1283
        %v1348 = vmul.f32 %v1332, %v1284
        %v1349 = vmul.f32 %v1333, %v1285
        %v1350 = vmul.f32 %v1334, %v1286
        %v1351 = vmul.f32 %v1335, %v1287
        %v1352 = vmul.f32 %v1336, %v1288
        %1353 = vrot.lane.b32.xlu0 %v1321, 64
        %v1354 = vpop.permute.xlu0 %1353
        %1355 = vrot.lane.b32.xlu0 %v1322, 64
        %v1356 = vpop.permute.xlu0 %1355
        %1357 = vrot.lane.b32.xlu0 %v1323, 64
        %v1358 = vpop.permute.xlu0 %1357
        %1359 = vrot.lane.b32.xlu0 %v1324, 64
        %v1360 = vpop.permute.xlu0 %1359
        %1361 = vrot.lane.b32.xlu0 %v1325, 64
        %v1362 = vpop.permute.xlu0 %1361
        %1363 = vrot.lane.b32.xlu0 %v1326, 64
        %v1364 = vpop.permute.xlu0 %1363
        %1365 = vrot.lane.b32.xlu0 %v1327, 64
        %v1366 = vpop.permute.xlu0 %1365
        %1367 = vrot.lane.b32.xlu0 %v1328, 64
        %v1368 = vpop.permute.xlu0 %1367
        %1369 = vrot.lane.b32.xlu0 %v1329, 64
        %v1370 = vpop.permute.xlu0 %1369
        %1371 = vrot.lane.b32.xlu0 %v1330, 64
        %v1372 = vpop.permute.xlu0 %1371
        %1373 = vrot.lane.b32.xlu0 %v1331, 64
        %v1374 = vpop.permute.xlu0 %1373
        %1375 = vrot.lane.b32.xlu0 %v1332, 64
        %v1376 = vpop.permute.xlu0 %1375
        %1377 = vrot.lane.b32.xlu0 %v1333, 64
        %v1378 = vpop.permute.xlu0 %1377
        %1379 = vrot.lane.b32.xlu0 %v1334, 64
        %v1380 = vpop.permute.xlu0 %1379
        %1381 = vrot.lane.b32.xlu0 %v1335, 64
        %v1382 = vpop.permute.xlu0 %1381
        %1383 = vrot.lane.b32.xlu0 %v1336, 64
        %v1384 = vpop.permute.xlu0 %1383
        %v1385 = vmul.f32 %v1354, %v1289
        %v1386 = vmul.f32 %v1356, %v1290
        %v1387 = vmul.f32 %v1358, %v1291
        %v1388 = vmul.f32 %v1360, %v1292
        %v1389 = vmul.f32 %v1362, %v1293
        %v1390 = vmul.f32 %v1364, %v1294
        %v1391 = vmul.f32 %v1366, %v1295
        %v1392 = vmul.f32 %v1368, %v1296
        %v1393 = vmul.f32 %v1370, %v1297
        %v1394 = vmul.f32 %v1372, %v1298
        %v1395 = vmul.f32 %v1374, %v1299
        %v1396 = vmul.f32 %v1376, %v1300
        %v1397 = vmul.f32 %v1378, %v1301
        %v1398 = vmul.f32 %v1380, %v1302
        %v1399 = vmul.f32 %v1382, %v1303
        %v1400 = vmul.f32 %v1384, %v1304
        %v1401 = vadd.f32 %v1337, %v1385
        %v1402 = vadd.f32 %v1338, %v1386
        %v1403 = vadd.f32 %v1339, %v1387
        %v1404 = vadd.f32 %v1340, %v1388
        %v1405 = vadd.f32 %v1341, %v1389
        %v1406 = vadd.f32 %v1342, %v1390
        %v1407 = vadd.f32 %v1343, %v1391
        %v1408 = vadd.f32 %v1344, %v1392
        %v1409 = vadd.f32 %v1345, %v1393
        %v1410 = vadd.f32 %v1346, %v1394
        %v1411 = vadd.f32 %v1347, %v1395
        %v1412 = vadd.f32 %v1348, %v1396
        %v1413 = vadd.f32 %v1349, %v1397
        %v1414 = vadd.f32 %v1350, %v1398
        %v1415 = vadd.f32 %v1351, %v1399
        %v1416 = vadd.f32 %v1352, %v1400
        %v1417 = vpack.c.bf16 %v1402, %v1401
        %v1418 = vpack.c.bf16 %v1404, %v1403
        %v1419 = vpack.c.bf16 %v1406, %v1405
        %v1420 = vpack.c.bf16 %v1408, %v1407
        %v1421 = vpack.c.bf16 %v1410, %v1409
        %v1422 = vpack.c.bf16 %v1412, %v1411
        %v1423 = vpack.c.bf16 %v1414, %v1413
        %v1424 = vpack.c.bf16 %v1416, %v1415
        %v1425 = vld [vmem:[#allocation2 + $0xc] sm:$0xf]
        %v1426 = vld [vmem:[#allocation2 + $0x1c] sm:$0xf]
        %v1427 = vld [vmem:[#allocation2 + $0x2c] sm:$0xf]
        %v1428 = vld [vmem:[#allocation2 + $0x3c] sm:$0xf]
        %v1429 = vld [vmem:[#allocation2 + $0x4c] sm:$0xf]
        %v1430 = vld [vmem:[#allocation2 + $0x5c] sm:$0xf]
        %v1431 = vld [vmem:[#allocation2 + $0x6c] sm:$0xf]
        %v1432 = vld [vmem:[#allocation2 + $0x7c] sm:$0xf]
        %v1433 = vld [vmem:[#allocation2 + $0x8c] sm:$0xf]
        %v1434 = vld [vmem:[#allocation2 + $0x9c] sm:$0xf]
        %v1435 = vld [vmem:[#allocation2 + $0xac] sm:$0xf]
        %v1436 = vld [vmem:[#allocation2 + $0xbc] sm:$0xf]
        %v1437 = vld [vmem:[#allocation2 + $0xcc] sm:$0xf]
        %v1438 = vld [vmem:[#allocation2 + $0xdc] sm:$0xf]
        %v1439 = vld [vmem:[#allocation2 + $0xec] sm:$0xf]
        %v1440 = vld [vmem:[#allocation2 + $0xfc] sm:$0xf]
        %v1441 = vld [vmem:[#allocation2] sm:$0xf]
        %v1442 = vld [vmem:[#allocation2 + $0x10] sm:$0xf]
        %v1443 = vld [vmem:[#allocation2 + $0x20] sm:$0xf]
        %v1444 = vld [vmem:[#allocation2 + $0x30] sm:$0xf]
        %v1445 = vld [vmem:[#allocation2 + $0x40] sm:$0xf]
        %v1446 = vld [vmem:[#allocation2 + $0x50] sm:$0xf]
        %v1447 = vld [vmem:[#allocation2 + $0x60] sm:$0xf]
        %v1448 = vld [vmem:[#allocation2 + $0x70] sm:$0xf]
        %v1449 = vld [vmem:[#allocation2 + $0x80] sm:$0xf]
        %v1450 = vld [vmem:[#allocation2 + $0x90] sm:$0xf]
        %v1451 = vld [vmem:[#allocation2 + $0xa0] sm:$0xf]
        %v1452 = vld [vmem:[#allocation2 + $0xb0] sm:$0xf]
        %v1453 = vld [vmem:[#allocation2 + $0xc0] sm:$0xf]
        %v1454 = vld [vmem:[#allocation2 + $0xd0] sm:$0xf]
        %v1455 = vld [vmem:[#allocation2 + $0xe0] sm:$0xf]
        %v1456 = vld [vmem:[#allocation2 + $0xf0] sm:$0xf]
        %v1457 = vunpack.c.l.bf16 %v1441
        %v1458 = vunpack.c.l.bf16 %v1442
        %v1459 = vunpack.c.l.bf16 %v1443
        %v1460 = vunpack.c.l.bf16 %v1444
        %v1461 = vunpack.c.l.bf16 %v1445
        %v1462 = vunpack.c.l.bf16 %v1446
        %v1463 = vunpack.c.l.bf16 %v1447
        %v1464 = vunpack.c.l.bf16 %v1448
        %v1465 = vunpack.c.l.bf16 %v1449
        %v1466 = vunpack.c.l.bf16 %v1450
        %v1467 = vunpack.c.l.bf16 %v1451
        %v1468 = vunpack.c.l.bf16 %v1452
        %v1469 = vunpack.c.l.bf16 %v1453
        %v1470 = vunpack.c.l.bf16 %v1454
        %v1471 = vunpack.c.l.bf16 %v1455
        %v1472 = vunpack.c.l.bf16 %v1456
        %v1473 = vmul.f32 %v1457, %v1273
        %v1474 = vmul.f32 %v1458, %v1274
        %v1475 = vmul.f32 %v1459, %v1275
        %v1476 = vmul.f32 %v1460, %v1276
        %v1477 = vmul.f32 %v1461, %v1277
        %v1478 = vmul.f32 %v1462, %v1278
        %v1479 = vmul.f32 %v1463, %v1279
        %v1480 = vmul.f32 %v1464, %v1280
        %v1481 = vmul.f32 %v1465, %v1281
        %v1482 = vmul.f32 %v1466, %v1282
        %v1483 = vmul.f32 %v1467, %v1283
        %v1484 = vmul.f32 %v1468, %v1284
        %v1485 = vmul.f32 %v1469, %v1285
        %v1486 = vmul.f32 %v1470, %v1286
        %v1487 = vmul.f32 %v1471, %v1287
        %v1488 = vmul.f32 %v1472, %v1288
        %1489 = vrot.lane.b32.xlu0 %v1457, 64
        %v1490 = vpop.permute.xlu0 %1489
        %1491 = vrot.lane.b32.xlu0 %v1458, 64
        %v1492 = vpop.permute.xlu0 %1491
        %1493 = vrot.lane.b32.xlu0 %v1459, 64
        %v1494 = vpop.permute.xlu0 %1493
        %1495 = vrot.lane.b32.xlu0 %v1460, 64
        %v1496 = vpop.permute.xlu0 %1495
        %1497 = vrot.lane.b32.xlu0 %v1461, 64
        %v1498 = vpop.permute.xlu0 %1497
        %1499 = vrot.lane.b32.xlu0 %v1462, 64
        %v1500 = vpop.permute.xlu0 %1499
        %1501 = vrot.lane.b32.xlu0 %v1463, 64
        %v1502 = vpop.permute.xlu0 %1501
        %1503 = vrot.lane.b32.xlu0 %v1464, 64
        %v1504 = vpop.permute.xlu0 %1503
        %1505 = vrot.lane.b32.xlu0 %v1465, 64
        %v1506 = vpop.permute.xlu0 %1505
        %1507 = vrot.lane.b32.xlu0 %v1466, 64
        %v1508 = vpop.permute.xlu0 %1507
        %1509 = vrot.lane.b32.xlu0 %v1467, 64
        %v1510 = vpop.permute.xlu0 %1509
        %1511 = vrot.lane.b32.xlu0 %v1468, 64
        %v1512 = vpop.permute.xlu0 %1511
        %1513 = vrot.lane.b32.xlu0 %v1469, 64
        %v1514 = vpop.permute.xlu0 %1513
        %1515 = vrot.lane.b32.xlu0 %v1470, 64
        %v1516 = vpop.permute.xlu0 %1515
        %1517 = vrot.lane.b32.xlu0 %v1471, 64
        %v1518 = vpop.permute.xlu0 %1517
        %1519 = vrot.lane.b32.xlu0 %v1472, 64
        %v1520 = vpop.permute.xlu0 %1519
        %v1521 = vmul.f32 %v1490, %v1289
        %v1522 = vmul.f32 %v1492, %v1290
        %v1523 = vmul.f32 %v1494, %v1291
        %v1524 = vmul.f32 %v1496, %v1292
        %v1525 = vmul.f32 %v1498, %v1293
        %v1526 = vmul.f32 %v1500, %v1294
        %v1527 = vmul.f32 %v1502, %v1295
        %v1528 = vmul.f32 %v1504, %v1296
        %v1529 = vmul.f32 %v1506, %v1297
        %v1530 = vmul.f32 %v1508, %v1298
        %v1531 = vmul.f32 %v1510, %v1299
        %v1532 = vmul.f32 %v1512, %v1300
        %v1533 = vmul.f32 %v1514, %v1301
        %v1534 = vmul.f32 %v1516, %v1302
        %v1535 = vmul.f32 %v1518, %v1303
        %v1536 = vmul.f32 %v1520, %v1304
        %v1537 = vadd.f32 %v1473, %v1521
        %v1538 = vadd.f32 %v1474, %v1522
        %v1539 = vadd.f32 %v1475, %v1523
        %v1540 = vadd.f32 %v1476, %v1524
        %v1541 = vadd.f32 %v1477, %v1525
        %v1542 = vadd.f32 %v1478, %v1526
        %v1543 = vadd.f32 %v1479, %v1527
        %v1544 = vadd.f32 %v1480, %v1528
        %v1545 = vadd.f32 %v1481, %v1529
        %v1546 = vadd.f32 %v1482, %v1530
        %v1547 = vadd.f32 %v1483, %v1531
        %v1548 = vadd.f32 %v1484, %v1532
        %v1549 = vadd.f32 %v1485, %v1533
        %v1550 = vadd.f32 %v1486, %v1534
        %v1551 = vadd.f32 %v1487, %v1535
        %v1552 = vadd.f32 %v1488, %v1536
        %v1553 = vld [vmem:[#allocation2 + $0x4] sm:$0xf]
        %v1554 = vld [vmem:[#allocation2 + $0x14] sm:$0xf]
        %v1555 = vld [vmem:[#allocation2 + $0x24] sm:$0xf]
        %v1556 = vld [vmem:[#allocation2 + $0x34] sm:$0xf]
        %v1557 = vld [vmem:[#allocation2 + $0x44] sm:$0xf]
        %v1558 = vld [vmem:[#allocation2 + $0x54] sm:$0xf]
        %v1559 = vld [vmem:[#allocation2 + $0x64] sm:$0xf]
        %v1560 = vld [vmem:[#allocation2 + $0x74] sm:$0xf]
        %v1561 = vld [vmem:[#allocation2 + $0x84] sm:$0xf]
        %v1562 = vld [vmem:[#allocation2 + $0x94] sm:$0xf]
        %v1563 = vld [vmem:[#allocation2 + $0xa4] sm:$0xf]
        %v1564 = vld [vmem:[#allocation2 + $0xb4] sm:$0xf]
        %v1565 = vld [vmem:[#allocation2 + $0xc4] sm:$0xf]
        %v1566 = vld [vmem:[#allocation2 + $0xd4] sm:$0xf]
        %v1567 = vld [vmem:[#allocation2 + $0xe4] sm:$0xf]
        %v1568 = vld [vmem:[#allocation2 + $0xf4] sm:$0xf]
        %v1569 = vunpack.c.l.bf16 %v1553
        %v1570 = vunpack.c.l.bf16 %v1554
        %v1571 = vunpack.c.l.bf16 %v1555
        %v1572 = vunpack.c.l.bf16 %v1556
        %v1573 = vunpack.c.l.bf16 %v1557
        %v1574 = vunpack.c.l.bf16 %v1558
        %v1575 = vunpack.c.l.bf16 %v1559
        %v1576 = vunpack.c.l.bf16 %v1560
        %v1577 = vunpack.c.l.bf16 %v1561
        %v1578 = vunpack.c.l.bf16 %v1562
        %v1579 = vunpack.c.l.bf16 %v1563
        %v1580 = vunpack.c.l.bf16 %v1564
        %v1581 = vunpack.c.l.bf16 %v1565
        %v1582 = vunpack.c.l.bf16 %v1566
        %v1583 = vunpack.c.l.bf16 %v1567
        %v1584 = vunpack.c.l.bf16 %v1568
        %v1585 = vmul.f32 %v1569, %v1273
        %v1586 = vmul.f32 %v1570, %v1274
        %v1587 = vmul.f32 %v1571, %v1275
        %v1588 = vmul.f32 %v1572, %v1276
        %v1589 = vmul.f32 %v1573, %v1277
        %v1590 = vmul.f32 %v1574, %v1278
        %v1591 = vmul.f32 %v1575, %v1279
        %v1592 = vmul.f32 %v1576, %v1280
        %v1593 = vmul.f32 %v1577, %v1281
        %v1594 = vmul.f32 %v1578, %v1282
        %v1595 = vmul.f32 %v1579, %v1283
        %v1596 = vmul.f32 %v1580, %v1284
        %v1597 = vmul.f32 %v1581, %v1285
        %v1598 = vmul.f32 %v1582, %v1286
        %v1599 = vmul.f32 %v1583, %v1287
        %v1600 = vmul.f32 %v1584, %v1288
        %1601 = vrot.lane.b32.xlu0 %v1569, 64
        %v1602 = vpop.permute.xlu0 %1601
        %1603 = vrot.lane.b32.xlu0 %v1570, 64
        %v1604 = vpop.permute.xlu0 %1603
        %1605 = vrot.lane.b32.xlu0 %v1571, 64
        %v1606 = vpop.permute.xlu0 %1605
        %1607 = vrot.lane.b32.xlu0 %v1572, 64
        %v1608 = vpop.permute.xlu0 %1607
        %1609 = vrot.lane.b32.xlu0 %v1573, 64
        %v1610 = vpop.permute.xlu0 %1609
        %1611 = vrot.lane.b32.xlu0 %v1574, 64
        %v1612 = vpop.permute.xlu0 %1611
        %1613 = vrot.lane.b32.xlu0 %v1575, 64
        %v1614 = vpop.permute.xlu0 %1613
        %1615 = vrot.lane.b32.xlu0 %v1576, 64
        %v1616 = vpop.permute.xlu0 %1615
        %1617 = vrot.lane.b32.xlu0 %v1577, 64
        %v1618 = vpop.permute.xlu0 %1617
        %1619 = vrot.lane.b32.xlu0 %v1578, 64
        %v1620 = vpop.permute.xlu0 %1619
        %1621 = vrot.lane.b32.xlu0 %v1579, 64
        %v1622 = vpop.permute.xlu0 %1621
        %1623 = vrot.lane.b32.xlu0 %v1580, 64
        %v1624 = vpop.permute.xlu0 %1623
        %1625 = vrot.lane.b32.xlu0 %v1581, 64
        %v1626 = vpop.permute.xlu0 %1625
        %1627 = vrot.lane.b32.xlu0 %v1582, 64
        %v1628 = vpop.permute.xlu0 %1627
        %1629 = vrot.lane.b32.xlu0 %v1583, 64
        %v1630 = vpop.permute.xlu0 %1629
        %1631 = vrot.lane.b32.xlu0 %v1584, 64
        %v1632 = vpop.permute.xlu0 %1631
        %v1633 = vmul.f32 %v1602, %v1289
        %v1634 = vmul.f32 %v1604, %v1290
        %v1635 = vmul.f32 %v1606, %v1291
        %v1636 = vmul.f32 %v1608, %v1292
        %v1637 = vmul.f32 %v1610, %v1293
        %v1638 = vmul.f32 %v1612, %v1294
        %v1639 = vmul.f32 %v1614, %v1295
        %v1640 = vmul.f32 %v1616, %v1296
        %v1641 = vmul.f32 %v1618, %v1297
        %v1642 = vmul.f32 %v1620, %v1298
        %v1643 = vmul.f32 %v1622, %v1299
        %v1644 = vmul.f32 %v1624, %v1300
        %v1645 = vmul.f32 %v1626, %v1301
        %v1646 = vmul.f32 %v1628, %v1302
        %v1647 = vmul.f32 %v1630, %v1303
        %v1648 = vmul.f32 %v1632, %v1304
        %v1649 = vadd.f32 %v1585, %v1633
        %v1650 = vadd.f32 %v1586, %v1634
        %v1651 = vadd.f32 %v1587, %v1635
        %v1652 = vadd.f32 %v1588, %v1636
        %v1653 = vadd.f32 %v1589, %v1637
        %v1654 = vadd.f32 %v1590, %v1638
        %v1655 = vadd.f32 %v1591, %v1639
        %v1656 = vadd.f32 %v1592, %v1640
        %v1657 = vadd.f32 %v1593, %v1641
        %v1658 = vadd.f32 %v1594, %v1642
        %v1659 = vadd.f32 %v1595, %v1643
        %v1660 = vadd.f32 %v1596, %v1644
        %v1661 = vadd.f32 %v1597, %v1645
        %v1662 = vadd.f32 %v1598, %v1646
        %v1663 = vadd.f32 %v1599, %v1647
        %v1664 = vadd.f32 %v1600, %v1648
        %v1665 = vpack.c.bf16 %v1538, %v1537
        %v1666 = vpack.c.bf16 %v1540, %v1539
        %v1667 = vpack.c.bf16 %v1542, %v1541
        %v1668 = vpack.c.bf16 %v1544, %v1543
        %v1669 = vpack.c.bf16 %v1546, %v1545
        %v1670 = vpack.c.bf16 %v1548, %v1547
        %v1671 = vpack.c.bf16 %v1550, %v1549
        %v1672 = vpack.c.bf16 %v1552, %v1551
        %v1673 = vpack.c.bf16 %v1650, %v1649
        %v1674 = vpack.c.bf16 %v1652, %v1651
        %v1675 = vpack.c.bf16 %v1654, %v1653
        %v1676 = vpack.c.bf16 %v1656, %v1655
        %v1677 = vpack.c.bf16 %v1658, %v1657
        %v1678 = vpack.c.bf16 %v1660, %v1659
        %v1679 = vpack.c.bf16 %v1662, %v1661
        %v1680 = vpack.c.bf16 %v1664, %v1663
        %v1681 = vlaneseq
        %v1682 = vshrl.u32 %v1681, 7
        %v1683 = vadd.s32 %v1682, 8
        %v1684 = vadd.s32 %v1682, 16
        %v1685 = vadd.s32 %v1682, 24
        %v1686 = vadd.s32 %v1682, 32
        %v1687 = vadd.s32 %v1682, 40
        %v1688 = vadd.s32 %v1682, 48
        %v1689 = vadd.s32 %v1682, 56
        %v1690 = vadd.s32 %v1682, 64
        %v1691 = vadd.s32 %v1682, 72
        %v1692 = vadd.s32 %v1682, 80
        %v1693 = vadd.s32 %v1682, 88
        %v1694 = vadd.s32 %v1682, 96
        %v1695 = vadd.s32 %v1682, 104
        %v1696 = vadd.s32 %v1682, 112
        %v1697 = vadd.s32 %v1682, 120
        %v1698 = vlaneseq
        %v1699 = vand.u32 %v1698, 127
        %vm1700 = vcmp.ge.s32.totalorder %v1682, %v1699
        %vm1701 = vcmp.ge.s32.totalorder %v1683, %v1699
        %vm1702 = vcmp.ge.s32.totalorder %v1684, %v1699
        %vm1703 = vcmp.ge.s32.totalorder %v1685, %v1699
        %vm1704 = vcmp.ge.s32.totalorder %v1686, %v1699
        %vm1705 = vcmp.ge.s32.totalorder %v1687, %v1699
        %vm1706 = vcmp.ge.s32.totalorder %v1688, %v1699
        %vm1707 = vcmp.ge.s32.totalorder %v1689, %v1699
        %vm1708 = vcmp.ge.s32.totalorder %v1690, %v1699
        %vm1709 = vcmp.ge.s32.totalorder %v1691, %v1699
        %vm1710 = vcmp.ge.s32.totalorder %v1692, %v1699
        %vm1711 = vcmp.ge.s32.totalorder %v1693, %v1699
        %vm1712 = vcmp.ge.s32.totalorder %v1694, %v1699
        %vm1713 = vcmp.ge.s32.totalorder %v1695, %v1699
        %vm1714 = vcmp.ge.s32.totalorder %v1696, %v1699
        %vm1715 = vcmp.ge.s32.totalorder %v1697, %v1699
        %v1716 = vld [vmem:[%s5] sm:$0x1]
        %v1717 = vlaneseq
        %v1718 = vshrl.u32 %v1717, 7
        %v1719 = vsub.s32 0, %v1718
        %v1720 = vrot.slane %v1716, %v1719
        %vm1721 = vcmp.lt.s32.totalorder %v1682, %v1720
        %vm1722 = vcmp.lt.s32.totalorder %v1683, %v1720
        %vm1723 = vcmp.lt.s32.totalorder %v1684, %v1720
        %vm1724 = vcmp.lt.s32.totalorder %v1685, %v1720
        %vm1725 = vcmp.lt.s32.totalorder %v1686, %v1720
        %vm1726 = vcmp.lt.s32.totalorder %v1687, %v1720
        %vm1727 = vcmp.lt.s32.totalorder %v1688, %v1720
        %vm1728 = vcmp.lt.s32.totalorder %v1689, %v1720
        %vm1729 = vcmp.lt.s32.totalorder %v1690, %v1720
        %vm1730 = vcmp.lt.s32.totalorder %v1691, %v1720
        %vm1731 = vcmp.lt.s32.totalorder %v1692, %v1720
        %vm1732 = vcmp.lt.s32.totalorder %v1693, %v1720
        %vm1733 = vcmp.lt.s32.totalorder %v1694, %v1720
        %vm1734 = vcmp.lt.s32.totalorder %v1695, %v1720
        %vm1735 = vcmp.lt.s32.totalorder %v1696, %v1720
        %vm1736 = vcmp.lt.s32.totalorder %v1697, %v1720
        %vm1737 = vmand %vm1700, %vm1721
        %vm1738 = vmand %vm1701, %vm1722
        %vm1739 = vmand %vm1702, %vm1723
        %vm1740 = vmand %vm1703, %vm1724
        %vm1741 = vmand %vm1704, %vm1725
        %vm1742 = vmand %vm1705, %vm1726
        %vm1743 = vmand %vm1706, %vm1727
        %vm1744 = vmand %vm1707, %vm1728
        %vm1745 = vmand %vm1708, %vm1729
        %vm1746 = vmand %vm1709, %vm1730
        %vm1747 = vmand %vm1710, %vm1731
        %vm1748 = vmand %vm1711, %vm1732
        %vm1749 = vmand %vm1712, %vm1733
        %vm1750 = vmand %vm1713, %vm1734
        %vm1751 = vmand %vm1714, %vm1735
        %vm1752 = vmand %vm1715, %vm1736
        %1753 = vmatprep.subr.bf16.mxu0 0
        %1754 = vmatpush1.bf16.xpose.msra.mxu0 %v1424
        %1755 = vmatprep.subr.bf16.mxu0 0
        %1756 = vmatpush1.bf16.xpose.msra.mxu0 %v1423
        %1757 = vmatprep.subr.bf16.mxu0 0
        %1758 = vmatpush1.bf16.xpose.msra.mxu0 %v1422
        %1759 = vmatprep.subr.bf16.mxu0 0
        %1760 = vmatpush1.bf16.xpose.msra.mxu0 %v1421
        %1761 = vmatprep.subr.bf16.mxu0 0
        %1762 = vmatpush1.bf16.xpose.msra.mxu0 %v1420
        %1763 = vmatprep.subr.bf16.mxu0 0
        %1764 = vmatpush1.bf16.xpose.msra.mxu0 %v1419
        %1765 = vmatprep.subr.bf16.mxu0 0
        %1766 = vmatpush1.bf16.xpose.msra.mxu0 %v1418
        %1767 = vmatprep.subr.bf16.mxu0 0
        %1768 = vmatpush1.bf16.xpose.msra.mxu0 %v1417
        %1769 = vmatprep.subr.bf16.mxu0 0
        %1770 = vmatpush2.bf16.xpose.msra.mxu0 0
        %1771 = vmatprep.subr.bf16.mxu0 0
        %1772 = vmatpush2.bf16.xpose.msra.mxu0 0
        %1773 = vmatprep.subr.bf16.mxu0 0
        %1774 = vmatpush2.bf16.xpose.msra.mxu0 0
        %1775 = vmatprep.subr.bf16.mxu0 0
        %1776 = vmatpush2.bf16.xpose.msra.mxu0 0
        %1777 = vmatprep.subr.bf16.mxu0 0
        %1778 = vmatpush2.bf16.xpose.msra.mxu0 0
        %1779 = vmatprep.subr.bf16.mxu0 0
        %1780 = vmatpush2.bf16.xpose.msra.mxu0 0
        %1781 = vmatprep.subr.bf16.mxu0 0
        %1782 = vmatpush2.bf16.xpose.msra.mxu0 0
        %1783 = vmatprep.subr.bf16.mxu0 0
        %1784 = vmatpush2.bf16.xpose.msra.mxu0 0
        %1785 = vmatprep.mubr.bf16.mxu0 0
        %1786 = vmatmul.mubr.bf16.gmra.mxu0 %v1665
        %v1787 = vpop.f32.mrf.mxu0
        %v1788 = vadd.f32 0.0, %v1787
        %v1789 = vpop.f32.mrf.mxu0
        %v1790 = vpop.f32.mrf.mxu0
        %v1791 = vadd.f32 0.0, %v1790
        %v1792 = vpop.f32.mrf.mxu0
        %1793 = vmatprep.mubr.bf16.mxu0 0
        %1794 = vmatmul.mubr.bf16.gmra.mxu0 %v1666
        %v1795 = vpop.f32.mrf.mxu0
        %v1796 = vadd.f32 0.0, %v1795
        %v1797 = vpop.f32.mrf.mxu0
        %v1798 = vpop.f32.mrf.mxu0
        %v1799 = vadd.f32 0.0, %v1798
        %v1800 = vpop.f32.mrf.mxu0
        %1801 = vmatprep.mubr.bf16.mxu0 0
        %1802 = vmatmul.mubr.bf16.gmra.mxu0 %v1667
        %v1803 = vpop.f32.mrf.mxu0
        %v1804 = vadd.f32 0.0, %v1803
        %v1805 = vpop.f32.mrf.mxu0
        %v1806 = vpop.f32.mrf.mxu0
        %v1807 = vadd.f32 0.0, %v1806
        %v1808 = vpop.f32.mrf.mxu0
        %1809 = vmatprep.mubr.bf16.mxu0 0
        %1810 = vmatmul.mubr.bf16.gmra.mxu0 %v1668
        %v1811 = vpop.f32.mrf.mxu0
        %v1812 = vadd.f32 0.0, %v1811
        %v1813 = vpop.f32.mrf.mxu0
        %v1814 = vpop.f32.mrf.mxu0
        %v1815 = vadd.f32 0.0, %v1814
        %v1816 = vpop.f32.mrf.mxu0
        %1817 = vmatprep.mubr.bf16.mxu0 0
        %1818 = vmatmul.mubr.bf16.gmra.mxu0 %v1669
        %v1819 = vpop.f32.mrf.mxu0
        %v1820 = vadd.f32 0.0, %v1819
        %v1821 = vpop.f32.mrf.mxu0
        %v1822 = vpop.f32.mrf.mxu0
        %v1823 = vadd.f32 0.0, %v1822
        %v1824 = vpop.f32.mrf.mxu0
        %1825 = vmatprep.mubr.bf16.mxu0 0
        %1826 = vmatmul.mubr.bf16.gmra.mxu0 %v1670
        %v1827 = vpop.f32.mrf.mxu0
        %v1828 = vadd.f32 0.0, %v1827
        %v1829 = vpop.f32.mrf.mxu0
        %v1830 = vpop.f32.mrf.mxu0
        %v1831 = vadd.f32 0.0, %v1830
        %v1832 = vpop.f32.mrf.mxu0
        %1833 = vmatprep.mubr.bf16.mxu0 0
        %1834 = vmatmul.mubr.bf16.gmra.mxu0 %v1671
        %v1835 = vpop.f32.mrf.mxu0
        %v1836 = vadd.f32 0.0, %v1835
        %v1837 = vpop.f32.mrf.mxu0
        %v1838 = vpop.f32.mrf.mxu0
        %v1839 = vadd.f32 0.0, %v1838
        %v1840 = vpop.f32.mrf.mxu0
        %1841 = vmatprep.mubr.bf16.mxu0 0
        %1842 = vmatmul.mubr.bf16.gmra.mxu0 %v1672
        %v1843 = vpop.f32.mrf.mxu0
        %v1844 = vadd.f32 0.0, %v1843
        %v1845 = vpop.f32.mrf.mxu0
        %v1846 = vpop.f32.mrf.mxu0
        %v1847 = vadd.f32 0.0, %v1846
        %v1848 = vpop.f32.mrf.mxu0
        %1849 = vmatprep.mubr.bf16.mxu0 0
        %1850 = vmatmul.mubr.bf16.gmra.mxu0 %v1673
        %v1851 = vpop.f32.mrf.mxu0
        %v1852 = vadd.f32 0.0, %v1851
        %v1853 = vpop.f32.mrf.mxu0
        %v1854 = vpop.f32.mrf.mxu0
        %v1855 = vadd.f32 0.0, %v1854
        %v1856 = vpop.f32.mrf.mxu0
        %1857 = vmatprep.mubr.bf16.mxu0 0
        %1858 = vmatmul.mubr.bf16.gmra.mxu0 %v1674
        %v1859 = vpop.f32.mrf.mxu0
        %v1860 = vadd.f32 0.0, %v1859
        %v1861 = vpop.f32.mrf.mxu0
        %v1862 = vpop.f32.mrf.mxu0
        %v1863 = vadd.f32 0.0, %v1862
        %v1864 = vpop.f32.mrf.mxu0
        %1865 = vmatprep.mubr.bf16.mxu0 0
        %1866 = vmatmul.mubr.bf16.gmra.mxu0 %v1675
        %v1867 = vpop.f32.mrf.mxu0
        %v1868 = vadd.f32 0.0, %v1867
        %v1869 = vpop.f32.mrf.mxu0
        %v1870 = vpop.f32.mrf.mxu0
        %v1871 = vadd.f32 0.0, %v1870
        %v1872 = vpop.f32.mrf.mxu0
        %1873 = vmatprep.mubr.bf16.mxu0 0
        %1874 = vmatmul.mubr.bf16.gmra.mxu0 %v1676
        %v1875 = vpop.f32.mrf.mxu0
        %v1876 = vadd.f32 0.0, %v1875
        %v1877 = vpop.f32.mrf.mxu0
        %v1878 = vpop.f32.mrf.mxu0
        %v1879 = vadd.f32 0.0, %v1878
        %v1880 = vpop.f32.mrf.mxu0
        %1881 = vmatprep.mubr.bf16.mxu0 0
        %1882 = vmatmul.mubr.bf16.gmra.mxu0 %v1677
        %v1883 = vpop.f32.mrf.mxu0
        %v1884 = vadd.f32 0.0, %v1883
        %v1885 = vpop.f32.mrf.mxu0
        %v1886 = vpop.f32.mrf.mxu0
        %v1887 = vadd.f32 0.0, %v1886
        %v1888 = vpop.f32.mrf.mxu0
        %1889 = vmatprep.mubr.bf16.mxu0 0
        %1890 = vmatmul.mubr.bf16.gmra.mxu0 %v1678
        %v1891 = vpop.f32.mrf.mxu0
        %v1892 = vadd.f32 0.0, %v1891
        %v1893 = vpop.f32.mrf.mxu0
        %v1894 = vpop.f32.mrf.mxu0
        %v1895 = vadd.f32 0.0, %v1894
        %v1896 = vpop.f32.mrf.mxu0
        %1897 = vmatprep.mubr.bf16.mxu0 0
        %1898 = vmatmul.mubr.bf16.gmra.mxu0 %v1679
        %v1899 = vpop.f32.mrf.mxu0
        %v1900 = vadd.f32 0.0, %v1899
        %v1901 = vpop.f32.mrf.mxu0
        %v1902 = vpop.f32.mrf.mxu0
        %v1903 = vadd.f32 0.0, %v1902
        %v1904 = vpop.f32.mrf.mxu0
        %1905 = vmatprep.mubr.bf16.mxu0 0
        %1906 = vmatmul.mubr.bf16.gmra.mxu0 %v1680
        %v1907 = vpop.f32.mrf.mxu0
        %v1908 = vadd.f32 0.0, %v1907
        %v1909 = vpop.f32.mrf.mxu0
        %v1910 = vpop.f32.mrf.mxu0
        %v1911 = vadd.f32 0.0, %v1910
        %v1912 = vpop.f32.mrf.mxu0
        %1913 = vdwg.mxu0
        %v1914 = vmul.f32 %v1788, 0.0017677669
        %v1915 = vmul.f32 %v1791, 0.0017677669
        %v1916 = vmul.f32 %v1796, 0.0017677669
        %v1917 = vmul.f32 %v1799, 0.0017677669
        %v1918 = vmul.f32 %v1804, 0.0017677669
        %v1919 = vmul.f32 %v1807, 0.0017677669
        %v1920 = vmul.f32 %v1812, 0.0017677669
        %v1921 = vmul.f32 %v1815, 0.0017677669
        %v1922 = vmul.f32 %v1820, 0.0017677669
        %v1923 = vmul.f32 %v1823, 0.0017677669
        %v1924 = vmul.f32 %v1828, 0.0017677669
        %v1925 = vmul.f32 %v1831, 0.0017677669
        %v1926 = vmul.f32 %v1836, 0.0017677669
        %v1927 = vmul.f32 %v1839, 0.0017677669
        %v1928 = vmul.f32 %v1844, 0.0017677669
        %v1929 = vmul.f32 %v1847, 0.0017677669
        %v1930 = vmul.f32 %v1852, 0.0017677669
        %v1931 = vmul.f32 %v1855, 0.0017677669
        %v1932 = vmul.f32 %v1860, 0.0017677669
        %v1933 = vmul.f32 %v1863, 0.0017677669
        %v1934 = vmul.f32 %v1868, 0.0017677669
        %v1935 = vmul.f32 %v1871, 0.0017677669
        %v1936 = vmul.f32 %v1876, 0.0017677669
        %v1937 = vmul.f32 %v1879, 0.0017677669
        %v1938 = vmul.f32 %v1884, 0.0017677669
        %v1939 = vmul.f32 %v1887, 0.0017677669
        %v1940 = vmul.f32 %v1892, 0.0017677669
        %v1941 = vmul.f32 %v1895, 0.0017677669
        %v1942 = vmul.f32 %v1900, 0.0017677669
        %v1943 = vmul.f32 %v1903, 0.0017677669
        %v1944 = vmul.f32 %v1908, 0.0017677669
        %v1945 = vmul.f32 %v1911, 0.0017677669
        %v1946 = vtanh.pop %v1914
        %v1947 = vtanh.pop %v1915
        %v1948 = vtanh.pop %v1916
        %v1949 = vtanh.pop %v1917
        %v1950 = vtanh.pop %v1918
        %v1951 = vtanh.pop %v1919
        %v1952 = vtanh.pop %v1920
        %v1953 = vtanh.pop %v1921
        %v1954 = vtanh.pop %v1922
        %v1955 = vtanh.pop %v1923
        %v1956 = vtanh.pop %v1924
        %v1957 = vtanh.pop %v1925
        %v1958 = vtanh.pop %v1926
        %v1959 = vtanh.pop %v1927
        %v1960 = vtanh.pop %v1928
        %v1961 = vtanh.pop %v1929
        %v1962 = vtanh.pop %v1930
        %v1963 = vtanh.pop %v1931
        %v1964 = vtanh.pop %v1932
        %v1965 = vtanh.pop %v1933
        %v1966 = vtanh.pop %v1934
        %v1967 = vtanh.pop %v1935
        %v1968 = vtanh.pop %v1936
        %v1969 = vtanh.pop %v1937
        %v1970 = vtanh.pop %v1938
        %v1971 = vtanh.pop %v1939
        %v1972 = vtanh.pop %v1940
        %v1973 = vtanh.pop %v1941
        %v1974 = vtanh.pop %v1942
        %v1975 = vtanh.pop %v1943
        %v1976 = vtanh.pop %v1944
        %v1977 = vtanh.pop %v1945
        %v1978 = vmul.f32 %v1946, 50.0
        %v1979 = vmul.f32 %v1947, 50.0
        %v1980 = vmul.f32 %v1948, 50.0
        %v1981 = vmul.f32 %v1949, 50.0
        %v1982 = vmul.f32 %v1950, 50.0
        %v1983 = vmul.f32 %v1951, 50.0
        %v1984 = vmul.f32 %v1952, 50.0
        %v1985 = vmul.f32 %v1953, 50.0
        %v1986 = vmul.f32 %v1954, 50.0
        %v1987 = vmul.f32 %v1955, 50.0
        %v1988 = vmul.f32 %v1956, 50.0
        %v1989 = vmul.f32 %v1957, 50.0
        %v1990 = vmul.f32 %v1958, 50.0
        %v1991 = vmul.f32 %v1959, 50.0
        %v1992 = vmul.f32 %v1960, 50.0
        %v1993 = vmul.f32 %v1961, 50.0
        %v1994 = vmul.f32 %v1962, 50.0
        %v1995 = vmul.f32 %v1963, 50.0
        %v1996 = vmul.f32 %v1964, 50.0
        %v1997 = vmul.f32 %v1965, 50.0
        %v1998 = vmul.f32 %v1966, 50.0
        %v1999 = vmul.f32 %v1967, 50.0
        %v2000 = vmul.f32 %v1968, 50.0
        %v2001 = vmul.f32 %v1969, 50.0
        %v2002 = vmul.f32 %v1970, 50.0
        %v2003 = vmul.f32 %v1971, 50.0
        %v2004 = vmul.f32 %v1972, 50.0
        %v2005 = vmul.f32 %v1973, 50.0
        %v2006 = vmul.f32 %v1974, 50.0
        %v2007 = vmul.f32 %v1975, 50.0
        %v2008 = vmul.f32 %v1976, 50.0
        %v2009 = vmul.f32 %v1977, 50.0
        %v2010 = vsel %vm1737, %v1978, -1e+30
        %v2011 = vsel %vm1738, %v1979, -1e+30
        %v2012 = vsel %vm1739, %v1980, -1e+30
        %v2013 = vsel %vm1740, %v1981, -1e+30
        %v2014 = vsel %vm1741, %v1982, -1e+30
        %v2015 = vsel %vm1742, %v1983, -1e+30
        %v2016 = vsel %vm1743, %v1984, -1e+30
        %v2017 = vsel %vm1744, %v1985, -1e+30
        %v2018 = vsel %vm1745, %v1986, -1e+30
        %v2019 = vsel %vm1746, %v1987, -1e+30
        %v2020 = vsel %vm1747, %v1988, -1e+30
        %v2021 = vsel %vm1748, %v1989, -1e+30
        %v2022 = vsel %vm1749, %v1990, -1e+30
        %v2023 = vsel %vm1750, %v1991, -1e+30
        %v2024 = vsel %vm1751, %v1992, -1e+30
        %v2025 = vsel %vm1752, %v1993, -1e+30
        %v2026 = vsel %vm1737, %v1994, -1e+30
        %v2027 = vsel %vm1738, %v1995, -1e+30
        %v2028 = vsel %vm1739, %v1996, -1e+30
        %v2029 = vsel %vm1740, %v1997, -1e+30
        %v2030 = vsel %vm1741, %v1998, -1e+30
        %v2031 = vsel %vm1742, %v1999, -1e+30
        %v2032 = vsel %vm1743, %v2000, -1e+30
        %v2033 = vsel %vm1744, %v2001, -1e+30
        %v2034 = vsel %vm1745, %v2002, -1e+30
        %v2035 = vsel %vm1746, %v2003, -1e+30
        %v2036 = vsel %vm1747, %v2004, -1e+30
        %v2037 = vsel %vm1748, %v2005, -1e+30
        %v2038 = vsel %vm1749, %v2006, -1e+30
        %v2039 = vsel %vm1750, %v2007, -1e+30
        %v2040 = vsel %vm1751, %v2008, -1e+30
        %v2041 = vsel %vm1752, %v2009, -1e+30
        %v2042 = vmul.f32 %v2010, 1.442695
        %v2043 = vpow.pop %v2042
        %v2044 = vmul.f32 %v2011, 1.442695
        %v2045 = vpow.pop %v2044
        %v2046 = vmul.f32 %v2012, 1.442695
        %v2047 = vpow.pop %v2046
        %v2048 = vmul.f32 %v2013, 1.442695
        %v2049 = vpow.pop %v2048
        %v2050 = vmul.f32 %v2014, 1.442695
        %v2051 = vpow.pop %v2050
        %v2052 = vmul.f32 %v2015, 1.442695
        %v2053 = vpow.pop %v2052
        %v2054 = vmul.f32 %v2016, 1.442695
        %v2055 = vpow.pop %v2054
        %v2056 = vmul.f32 %v2017, 1.442695
        %v2057 = vpow.pop %v2056
        %v2058 = vmul.f32 %v2018, 1.442695
        %v2059 = vpow.pop %v2058
        %v2060 = vmul.f32 %v2019, 1.442695
        %v2061 = vpow.pop %v2060
        %v2062 = vmul.f32 %v2020, 1.442695
        %v2063 = vpow.pop %v2062
        %v2064 = vmul.f32 %v2021, 1.442695
        %v2065 = vpow.pop %v2064
        %v2066 = vmul.f32 %v2022, 1.442695
        %v2067 = vpow.pop %v2066
        %v2068 = vmul.f32 %v2023, 1.442695
        %v2069 = vpow.pop %v2068
        %v2070 = vmul.f32 %v2024, 1.442695
        %v2071 = vpow.pop %v2070
        %v2072 = vmul.f32 %v2025, 1.442695
        %v2073 = vpow.pop %v2072
        %v2074 = vmul.f32 %v2026, 1.442695
        %v2075 = vpow.pop %v2074
        %v2076 = vmul.f32 %v2027, 1.442695
        %v2077 = vpow.pop %v2076
        %v2078 = vmul.f32 %v2028, 1.442695
        %v2079 = vpow.pop %v2078
        %v2080 = vmul.f32 %v2029, 1.442695
        %v2081 = vpow.pop %v2080
        %v2082 = vmul.f32 %v2030, 1.442695
        %v2083 = vpow.pop %v2082
        %v2084 = vmul.f32 %v2031, 1.442695
        %v2085 = vpow.pop %v2084
        %v2086 = vmul.f32 %v2032, 1.442695
        %v2087 = vpow.pop %v2086
        %v2088 = vmul.f32 %v2033, 1.442695
        %v2089 = vpow.pop %v2088
        %v2090 = vmul.f32 %v2034, 1.442695
        %v2091 = vpow.pop %v2090
        %v2092 = vmul.f32 %v2035, 1.442695
        %v2093 = vpow.pop %v2092
        %v2094 = vmul.f32 %v2036, 1.442695
        %v2095 = vpow.pop %v2094
        %v2096 = vmul.f32 %v2037, 1.442695
        %v2097 = vpow.pop %v2096
        %v2098 = vmul.f32 %v2038, 1.442695
        %v2099 = vpow.pop %v2098
        %v2100 = vmul.f32 %v2039, 1.442695
        %v2101 = vpow.pop %v2100
        %v2102 = vmul.f32 %v2040, 1.442695
        %v2103 = vpow.pop %v2102
        %v2104 = vmul.f32 %v2041, 1.442695
        %v2105 = vpow.pop %v2104
        %2106 = vadd.xlane.f32.xlu0 %v2043
        %v2107 = vpop.xlane.xlu0 %2106
        %2108 = vadd.xlane.f32.xlu0 %v2045
        %v2109 = vpop.xlane.xlu0 %2108
        %2110 = vadd.xlane.f32.xlu0 %v2047
        %v2111 = vpop.xlane.xlu0 %2110
        %2112 = vadd.xlane.f32.xlu0 %v2049
        %v2113 = vpop.xlane.xlu0 %2112
        %2114 = vadd.xlane.f32.xlu0 %v2051
        %v2115 = vpop.xlane.xlu0 %2114
        %2116 = vadd.xlane.f32.xlu0 %v2053
        %v2117 = vpop.xlane.xlu0 %2116
        %2118 = vadd.xlane.f32.xlu0 %v2055
        %v2119 = vpop.xlane.xlu0 %2118
        %2120 = vadd.xlane.f32.xlu0 %v2057
        %v2121 = vpop.xlane.xlu0 %2120
        %2122 = vadd.xlane.f32.xlu0 %v2059
        %v2123 = vpop.xlane.xlu0 %2122
        %2124 = vadd.xlane.f32.xlu0 %v2061
        %v2125 = vpop.xlane.xlu0 %2124
        %2126 = vadd.xlane.f32.xlu0 %v2063
        %v2127 = vpop.xlane.xlu0 %2126
        %2128 = vadd.xlane.f32.xlu0 %v2065
        %v2129 = vpop.xlane.xlu0 %2128
        %2130 = vadd.xlane.f32.xlu0 %v2067
        %v2131 = vpop.xlane.xlu0 %2130
        %2132 = vadd.xlane.f32.xlu0 %v2069
        %v2133 = vpop.xlane.xlu0 %2132
        %2134 = vadd.xlane.f32.xlu0 %v2071
        %v2135 = vpop.xlane.xlu0 %2134
        %2136 = vadd.xlane.f32.xlu0 %v2073
        %v2137 = vpop.xlane.xlu0 %2136
        %2138 = vadd.xlane.f32.xlu0 %v2075
        %v2139 = vpop.xlane.xlu0 %2138
        %2140 = vadd.xlane.f32.xlu0 %v2077
        %v2141 = vpop.xlane.xlu0 %2140
        %2142 = vadd.xlane.f32.xlu0 %v2079
        %v2143 = vpop.xlane.xlu0 %2142
        %2144 = vadd.xlane.f32.xlu0 %v2081
        %v2145 = vpop.xlane.xlu0 %2144
        %2146 = vadd.xlane.f32.xlu0 %v2083
        %v2147 = vpop.xlane.xlu0 %2146
        %2148 = vadd.xlane.f32.xlu0 %v2085
        %v2149 = vpop.xlane.xlu0 %2148
        %2150 = vadd.xlane.f32.xlu0 %v2087
        %v2151 = vpop.xlane.xlu0 %2150
        %2152 = vadd.xlane.f32.xlu0 %v2089
        %v2153 = vpop.xlane.xlu0 %2152
        %2154 = vadd.xlane.f32.xlu0 %v2091
        %v2155 = vpop.xlane.xlu0 %2154
        %2156 = vadd.xlane.f32.xlu0 %v2093
        %v2157 = vpop.xlane.xlu0 %2156
        %2158 = vadd.xlane.f32.xlu0 %v2095
        %v2159 = vpop.xlane.xlu0 %2158
        %2160 = vadd.xlane.f32.xlu0 %v2097
        %v2161 = vpop.xlane.xlu0 %2160
        %2162 = vadd.xlane.f32.xlu0 %v2099
        %v2163 = vpop.xlane.xlu0 %2162
        %2164 = vadd.xlane.f32.xlu0 %v2101
        %v2165 = vpop.xlane.xlu0 %2164
        %2166 = vadd.xlane.f32.xlu0 %v2103
        %v2167 = vpop.xlane.xlu0 %2166
        %2168 = vadd.xlane.f32.xlu0 %v2105
        %v2169 = vpop.xlane.xlu0 %2168
        %v2170 = vrcp.pop %v2107
        %v2171 = vrcp.pop %v2109
        %v2172 = vrcp.pop %v2111
        %v2173 = vrcp.pop %v2113
        %v2174 = vrcp.pop %v2115
        %v2175 = vrcp.pop %v2117
        %v2176 = vrcp.pop %v2119
        %v2177 = vrcp.pop %v2121
        %v2178 = vrcp.pop %v2123
        %v2179 = vrcp.pop %v2125
        %v2180 = vrcp.pop %v2127
        %v2181 = vrcp.pop %v2129
        %v2182 = vrcp.pop %v2131
        %v2183 = vrcp.pop %v2133
        %v2184 = vrcp.pop %v2135
        %v2185 = vrcp.pop %v2137
        %v2186 = vrcp.pop %v2139
        %v2187 = vrcp.pop %v2141
        %v2188 = vrcp.pop %v2143
        %v2189 = vrcp.pop %v2145
        %v2190 = vrcp.pop %v2147
        %v2191 = vrcp.pop %v2149
        %v2192 = vrcp.pop %v2151
        %v2193 = vrcp.pop %v2153
        %v2194 = vrcp.pop %v2155
        %v2195 = vrcp.pop %v2157
        %v2196 = vrcp.pop %v2159
        %v2197 = vrcp.pop %v2161
        %v2198 = vrcp.pop %v2163
        %v2199 = vrcp.pop %v2165
        %v2200 = vrcp.pop %v2167
        %v2201 = vrcp.pop %v2169
        %v2202 = vmul.f32 %v2043, %v2170
        %v2203 = vmul.f32 %v2045, %v2171
        %v2204 = vmul.f32 %v2047, %v2172
        %v2205 = vmul.f32 %v2049, %v2173
        %v2206 = vmul.f32 %v2051, %v2174
        %v2207 = vmul.f32 %v2053, %v2175
        %v2208 = vmul.f32 %v2055, %v2176
        %v2209 = vmul.f32 %v2057, %v2177
        %v2210 = vmul.f32 %v2059, %v2178
        %v2211 = vmul.f32 %v2061, %v2179
        %v2212 = vmul.f32 %v2063, %v2180
        %v2213 = vmul.f32 %v2065, %v2181
        %v2214 = vmul.f32 %v2067, %v2182
        %v2215 = vmul.f32 %v2069, %v2183
        %v2216 = vmul.f32 %v2071, %v2184
        %v2217 = vmul.f32 %v2073, %v2185
        %v2218 = vmul.f32 %v2075, %v2186
        %v2219 = vmul.f32 %v2077, %v2187
        %v2220 = vmul.f32 %v2079, %v2188
        %v2221 = vmul.f32 %v2081, %v2189
        %v2222 = vmul.f32 %v2083, %v2190
        %v2223 = vmul.f32 %v2085, %v2191
        %v2224 = vmul.f32 %v2087, %v2192
        %v2225 = vmul.f32 %v2089, %v2193
        %v2226 = vmul.f32 %v2091, %v2194
        %v2227 = vmul.f32 %v2093, %v2195
        %v2228 = vmul.f32 %v2095, %v2196
        %v2229 = vmul.f32 %v2097, %v2197
        %v2230 = vmul.f32 %v2099, %v2198
        %v2231 = vmul.f32 %v2101, %v2199
        %v2232 = vmul.f32 %v2103, %v2200
        %v2233 = vmul.f32 %v2105, %v2201
        %v2234 = vpack.c.bf16 %v2203, %v2202
        %v2235 = vpack.c.bf16 %v2205, %v2204
        %v2236 = vpack.c.bf16 %v2207, %v2206
        %v2237 = vpack.c.bf16 %v2209, %v2208
        %v2238 = vpack.c.bf16 %v2211, %v2210
        %v2239 = vpack.c.bf16 %v2213, %v2212
        %v2240 = vpack.c.bf16 %v2215, %v2214
        %v2241 = vpack.c.bf16 %v2217, %v2216
        %v2242 = vpack.c.bf16 %v2219, %v2218
        %v2243 = vpack.c.bf16 %v2221, %v2220
        %v2244 = vpack.c.bf16 %v2223, %v2222
        %v2245 = vpack.c.bf16 %v2225, %v2224
        %v2246 = vpack.c.bf16 %v2227, %v2226
        %v2247 = vpack.c.bf16 %v2229, %v2228
        %v2248 = vpack.c.bf16 %v2231, %v2230
        %v2249 = vpack.c.bf16 %v2233, %v2232
        %v2266 = vunpack.c.l.b16 %v1425
        %v2267 = vunpack.c.l.b16 %v1426
        %v2268 = vunpack.c.l.b16 %v1427
        %v2269 = vunpack.c.l.b16 %v1428
        %v2270 = vunpack.c.l.b16 %v1429
        %v2271 = vunpack.c.l.b16 %v1430
        %v2272 = vunpack.c.l.b16 %v1431
        %v2273 = vunpack.c.l.b16 %v1432
        %v2274 = vunpack.c.l.b16 %v1433
        %v2275 = vunpack.c.l.b16 %v1434
        %v2276 = vunpack.c.l.b16 %v1435
        %v2277 = vunpack.c.l.b16 %v1436
        %v2278 = vunpack.c.l.b16 %v1437
        %v2279 = vunpack.c.l.b16 %v1438
        %v2280 = vunpack.c.l.b16 %v1439
        %v2281 = vunpack.c.l.b16 %v1440
        %v2282 = vpack.c.b16 %v2267, %v2266
        %v2283 = vpack.c.b16 %v2269, %v2268
        %v2284 = vpack.c.b16 %v2271, %v2270
        %v2285 = vpack.c.b16 %v2273, %v2272
        %v2286 = vpack.c.b16 %v2275, %v2274
        %v2287 = vpack.c.b16 %v2277, %v2276
        %v2288 = vpack.c.b16 %v2279, %v2278
        %v2289 = vpack.c.b16 %v2281, %v2280
        %2298 = vmatprep.subr.bf16.mxu0 0
        %2299 = vmatpush1.bf16.msra.mxu0 %v2289
        %2300 = vmatprep.subr.bf16.mxu0 0
        %2301 = vmatpush1.bf16.msra.mxu0 %v2288
        %2302 = vmatprep.subr.bf16.mxu0 0
        %2303 = vmatpush1.bf16.msra.mxu0 %v2287
        %2304 = vmatprep.subr.bf16.mxu0 0
        %2305 = vmatpush1.bf16.msra.mxu0 %v2286
        %2306 = vmatprep.subr.bf16.mxu0 0
        %2307 = vmatpush1.bf16.msra.mxu0 %v2285
        %2308 = vmatprep.subr.bf16.mxu0 0
        %2309 = vmatpush1.bf16.msra.mxu0 %v2284
        %2310 = vmatprep.subr.bf16.mxu0 0
        %2311 = vmatpush1.bf16.msra.mxu0 %v2283
        %2312 = vmatprep.subr.bf16.mxu0 0
        %2313 = vmatpush1.bf16.msra.mxu0 %v2282
        %2314 = vmatprep.subr.bf16.mxu0 0
        %2315 = vmatpush2.bf16.msra.mxu0 0
        %2316 = vmatprep.subr.bf16.mxu0 0
        %2317 = vmatpush2.bf16.msra.mxu0 0
        %2318 = vmatprep.subr.bf16.mxu0 0
        %2319 = vmatpush2.bf16.msra.mxu0 0
        %2320 = vmatprep.subr.bf16.mxu0 0
        %2321 = vmatpush2.bf16.msra.mxu0 0
        %2322 = vmatprep.subr.bf16.mxu0 0
        %2323 = vmatpush2.bf16.msra.mxu0 0
        %2324 = vmatprep.subr.bf16.mxu0 0
        %2325 = vmatpush2.bf16.msra.mxu0 0
        %2326 = vmatprep.subr.bf16.mxu0 0
        %2327 = vmatpush2.bf16.msra.mxu0 0
        %2328 = vmatprep.subr.bf16.mxu0 0
        %2329 = vmatpush2.bf16.msra.mxu0 0
        %2330 = vmatprep.mubr.bf16.mxu0 0
        %2331 = vmatmul.mubr.bf16.gmra.mxu0 %v2234
        %v2332 = vpop.f32.mrf.mxu0
        %v2333 = vadd.f32 0.0, %v2332
        %v2334 = vpop.f32.mrf.mxu0
        %v2335 = vpop.f32.mrf.mxu0
        %v2336 = vadd.f32 0.0, %v2335
        %v2337 = vpop.f32.mrf.mxu0
        %2338 = vmatprep.mubr.bf16.mxu0 0
        %2339 = vmatmul.mubr.bf16.gmra.mxu0 %v2235
        %v2340 = vpop.f32.mrf.mxu0
        %v2341 = vadd.f32 0.0, %v2340
        %v2342 = vpop.f32.mrf.mxu0
        %v2343 = vpop.f32.mrf.mxu0
        %v2344 = vadd.f32 0.0, %v2343
        %v2345 = vpop.f32.mrf.mxu0
        %2346 = vmatprep.mubr.bf16.mxu0 0
        %2347 = vmatmul.mubr.bf16.gmra.mxu0 %v2236
        %v2348 = vpop.f32.mrf.mxu0
        %v2349 = vadd.f32 0.0, %v2348
        %v2350 = vpop.f32.mrf.mxu0
        %v2351 = vpop.f32.mrf.mxu0
        %v2352 = vadd.f32 0.0, %v2351
        %v2353 = vpop.f32.mrf.mxu0
        %2354 = vmatprep.mubr.bf16.mxu0 0
        %2355 = vmatmul.mubr.bf16.gmra.mxu0 %v2237
        %v2356 = vpop.f32.mrf.mxu0
        %v2357 = vadd.f32 0.0, %v2356
        %v2358 = vpop.f32.mrf.mxu0
        %v2359 = vpop.f32.mrf.mxu0
        %v2360 = vadd.f32 0.0, %v2359
        %v2361 = vpop.f32.mrf.mxu0
        %2362 = vmatprep.mubr.bf16.mxu0 0
        %2363 = vmatmul.mubr.bf16.gmra.mxu0 %v2238
        %v2364 = vpop.f32.mrf.mxu0
        %v2365 = vadd.f32 0.0, %v2364
        %v2366 = vpop.f32.mrf.mxu0
        %v2367 = vpop.f32.mrf.mxu0
        %v2368 = vadd.f32 0.0, %v2367
        %v2369 = vpop.f32.mrf.mxu0
        %2370 = vmatprep.mubr.bf16.mxu0 0
        %2371 = vmatmul.mubr.bf16.gmra.mxu0 %v2239
        %v2372 = vpop.f32.mrf.mxu0
        %v2373 = vadd.f32 0.0, %v2372
        %v2374 = vpop.f32.mrf.mxu0
        %v2375 = vpop.f32.mrf.mxu0
        %v2376 = vadd.f32 0.0, %v2375
        %v2377 = vpop.f32.mrf.mxu0
        %2378 = vmatprep.mubr.bf16.mxu0 0
        %2379 = vmatmul.mubr.bf16.gmra.mxu0 %v2240
        %v2380 = vpop.f32.mrf.mxu0
        %v2381 = vadd.f32 0.0, %v2380
        %v2382 = vpop.f32.mrf.mxu0
        %v2383 = vpop.f32.mrf.mxu0
        %v2384 = vadd.f32 0.0, %v2383
        %v2385 = vpop.f32.mrf.mxu0
        %2386 = vmatprep.mubr.bf16.mxu0 0
        %2387 = vmatmul.mubr.bf16.gmra.mxu0 %v2241
        %v2388 = vpop.f32.mrf.mxu0
        %v2389 = vadd.f32 0.0, %v2388
        %v2390 = vpop.f32.mrf.mxu0
        %v2391 = vpop.f32.mrf.mxu0
        %v2392 = vadd.f32 0.0, %v2391
        %v2393 = vpop.f32.mrf.mxu0
        %2394 = vmatprep.mubr.bf16.mxu0 0
        %2395 = vmatmul.mubr.bf16.gmra.mxu0 %v2242
        %v2396 = vpop.f32.mrf.mxu0
        %v2397 = vadd.f32 0.0, %v2396
        %v2398 = vpop.f32.mrf.mxu0
        %v2399 = vpop.f32.mrf.mxu0
        %v2400 = vadd.f32 0.0, %v2399
        %v2401 = vpop.f32.mrf.mxu0
        %2402 = vmatprep.mubr.bf16.mxu0 0
        %2403 = vmatmul.mubr.bf16.gmra.mxu0 %v2243
        %v2404 = vpop.f32.mrf.mxu0
        %v2405 = vadd.f32 0.0, %v2404
        %v2406 = vpop.f32.mrf.mxu0
        %v2407 = vpop.f32.mrf.mxu0
        %v2408 = vadd.f32 0.0, %v2407
        %v2409 = vpop.f32.mrf.mxu0
        %2410 = vmatprep.mubr.bf16.mxu0 0
        %2411 = vmatmul.mubr.bf16.gmra.mxu0 %v2244
        %v2412 = vpop.f32.mrf.mxu0
        %v2413 = vadd.f32 0.0, %v2412
        %v2414 = vpop.f32.mrf.mxu0
        %v2415 = vpop.f32.mrf.mxu0
        %v2416 = vadd.f32 0.0, %v2415
        %v2417 = vpop.f32.mrf.mxu0
        %2418 = vmatprep.mubr.bf16.mxu0 0
        %2419 = vmatmul.mubr.bf16.gmra.mxu0 %v2245
        %v2420 = vpop.f32.mrf.mxu0
        %v2421 = vadd.f32 0.0, %v2420
        %v2422 = vpop.f32.mrf.mxu0
        %v2423 = vpop.f32.mrf.mxu0
        %v2424 = vadd.f32 0.0, %v2423
        %v2425 = vpop.f32.mrf.mxu0
        %2426 = vmatprep.mubr.bf16.mxu0 0
        %2427 = vmatmul.mubr.bf16.gmra.mxu0 %v2246
        %v2428 = vpop.f32.mrf.mxu0
        %v2429 = vadd.f32 0.0, %v2428
        %v2430 = vpop.f32.mrf.mxu0
        %v2431 = vpop.f32.mrf.mxu0
        %v2432 = vadd.f32 0.0, %v2431
        %v2433 = vpop.f32.mrf.mxu0
        %2434 = vmatprep.mubr.bf16.mxu0 0
        %2435 = vmatmul.mubr.bf16.gmra.mxu0 %v2247
        %v2436 = vpop.f32.mrf.mxu0
        %v2437 = vadd.f32 0.0, %v2436
        %v2438 = vpop.f32.mrf.mxu0
        %v2439 = vpop.f32.mrf.mxu0
        %v2440 = vadd.f32 0.0, %v2439
        %v2441 = vpop.f32.mrf.mxu0
        %2442 = vmatprep.mubr.bf16.mxu0 0
        %2443 = vmatmul.mubr.bf16.gmra.mxu0 %v2248
        %v2444 = vpop.f32.mrf.mxu0
        %v2445 = vadd.f32 0.0, %v2444
        %v2446 = vpop.f32.mrf.mxu0
        %v2447 = vpop.f32.mrf.mxu0
        %v2448 = vadd.f32 0.0, %v2447
        %v2449 = vpop.f32.mrf.mxu0
        %2450 = vmatprep.mubr.bf16.mxu0 0
        %2451 = vmatmul.mubr.bf16.gmra.mxu0 %v2249
        %v2452 = vpop.f32.mrf.mxu0
        %v2453 = vadd.f32 0.0, %v2452
        %v2454 = vpop.f32.mrf.mxu0
        %v2455 = vpop.f32.mrf.mxu0
        %v2456 = vadd.f32 0.0, %v2455
        %v2457 = vpop.f32.mrf.mxu0
        %2458 = vdwg.mxu0
        %v2459 = vpack.c.bf16 %v2336, %v2333
        %v2460 = vpack.c.bf16 %v2400, %v2397
        %v2461 = vpack.c.bf16 %v2344, %v2341
        %v2462 = vpack.c.bf16 %v2408, %v2405
        %v2463 = vpack.c.bf16 %v2352, %v2349
        %v2464 = vpack.c.bf16 %v2416, %v2413
        %v2465 = vpack.c.bf16 %v2360, %v2357
        %v2466 = vpack.c.bf16 %v2424, %v2421
        %v2467 = vpack.c.bf16 %v2368, %v2365
        %v2468 = vpack.c.bf16 %v2432, %v2429
        %v2469 = vpack.c.bf16 %v2376, %v2373
        %v2470 = vpack.c.bf16 %v2440, %v2437
        %v2471 = vpack.c.bf16 %v2384, %v2381
        %v2472 = vpack.c.bf16 %v2448, %v2445
        %v2473 = vpack.c.bf16 %v2392, %v2389
        %v2474 = vpack.c.bf16 %v2456, %v2453
        %v2475 = vld [vmem:[%s303] sm:$0xff]
        %v2476 = vld [vmem:[%s303 + $0x8] sm:$0xff]
        %v2477 = vld [vmem:[%s303 + $0x10] sm:$0xff]
        %v2478 = vld [vmem:[%s303 + $0x18] sm:$0xff]
        %v2479 = vld [vmem:[%s303 + $0x20] sm:$0xff]
        %v2480 = vld [vmem:[%s303 + $0x28] sm:$0xff]
        %v2481 = vld [vmem:[%s303 + $0x30] sm:$0xff]
        %v2482 = vld [vmem:[%s303 + $0x38] sm:$0xff]
        %v2483 = vld [vmem:[%s303 + $0x40] sm:$0xff]
        %v2484 = vld [vmem:[%s303 + $0x48] sm:$0xff]
        %v2485 = vld [vmem:[%s303 + $0x50] sm:$0xff]
        %v2486 = vld [vmem:[%s303 + $0x58] sm:$0xff]
        %v2487 = vld [vmem:[%s303 + $0x60] sm:$0xff]
        %v2488 = vld [vmem:[%s303 + $0x68] sm:$0xff]
        %v2489 = vld [vmem:[%s303 + $0x70] sm:$0xff]
        %v2490 = vld [vmem:[%s303 + $0x78] sm:$0xff]
        %v2491 = vld [vmem:[%s303 + $0x80] sm:$0xff]
        %v2492 = vld [vmem:[%s303 + $0x88] sm:$0xff]
        %v2493 = vld [vmem:[%s303 + $0x90] sm:$0xff]
        %v2494 = vld [vmem:[%s303 + $0x98] sm:$0xff]
        %v2495 = vld [vmem:[%s303 + $0xa0] sm:$0xff]
        %v2496 = vld [vmem:[%s303 + $0xa8] sm:$0xff]
        %v2497 = vld [vmem:[%s303 + $0xb0] sm:$0xff]
        %v2498 = vld [vmem:[%s303 + $0xb8] sm:$0xff]
        %v2499 = vld [vmem:[%s303 + $0xc0] sm:$0xff]
        %v2500 = vld [vmem:[%s303 + $0xc8] sm:$0xff]
        %v2501 = vld [vmem:[%s303 + $0xd0] sm:$0xff]
        %v2502 = vld [vmem:[%s303 + $0xd8] sm:$0xff]
        %v2503 = vld [vmem:[%s303 + $0xe0] sm:$0xff]
        %v2504 = vld [vmem:[%s303 + $0xe8] sm:$0xff]
        %v2505 = vld [vmem:[%s303 + $0xf0] sm:$0xff]
        %v2506 = vld [vmem:[%s303 + $0xf8] sm:$0xff]
        %v2539 = vunpack.c.l.b16 %v2475
        %v2540 = vunpack.c.h.b16 %v2475
        %v2541 = vunpack.c.l.b16 %v2476
        %v2542 = vunpack.c.h.b16 %v2476
        %v2543 = vunpack.c.l.b16 %v2477
        %v2544 = vunpack.c.h.b16 %v2477
        %v2545 = vunpack.c.l.b16 %v2478
        %v2546 = vunpack.c.h.b16 %v2478
        %v2547 = vunpack.c.l.b16 %v2479
        %v2548 = vunpack.c.h.b16 %v2479
        %v2549 = vunpack.c.l.b16 %v2480
        %v2550 = vunpack.c.h.b16 %v2480
        %v2551 = vunpack.c.l.b16 %v2481
        %v2552 = vunpack.c.h.b16 %v2481
        %v2553 = vunpack.c.l.b16 %v2482
        %v2554 = vunpack.c.h.b16 %v2482
        %v2555 = vunpack.c.l.b16 %v2483
        %v2556 = vunpack.c.h.b16 %v2483
        %v2557 = vunpack.c.l.b16 %v2484
        %v2558 = vunpack.c.h.b16 %v2484
        %v2559 = vunpack.c.l.b16 %v2485
        %v2560 = vunpack.c.h.b16 %v2485
        %v2561 = vunpack.c.l.b16 %v2486
        %v2562 = vunpack.c.h.b16 %v2486
        %v2563 = vunpack.c.l.b16 %v2487
        %v2564 = vunpack.c.h.b16 %v2487
        %v2565 = vunpack.c.l.b16 %v2488
        %v2566 = vunpack.c.h.b16 %v2488
        %v2567 = vunpack.c.l.b16 %v2489
        %v2568 = vunpack.c.h.b16 %v2489
        %v2569 = vunpack.c.l.b16 %v2490
        %v2570 = vunpack.c.h.b16 %v2490
        %v2571 = vunpack.c.l.b16 %v2491
        %v2572 = vunpack.c.h.b16 %v2491
        %v2573 = vunpack.c.l.b16 %v2492
        %v2574 = vunpack.c.h.b16 %v2492
        %v2575 = vunpack.c.l.b16 %v2493
        %v2576 = vunpack.c.h.b16 %v2493
        %v2577 = vunpack.c.l.b16 %v2494
        %v2578 = vunpack.c.h.b16 %v2494
        %v2579 = vunpack.c.l.b16 %v2495
        %v2580 = vunpack.c.h.b16 %v2495
        %v2581 = vunpack.c.l.b16 %v2496
        %v2582 = vunpack.c.h.b16 %v2496
        %v2583 = vunpack.c.l.b16 %v2497
        %v2584 = vunpack.c.h.b16 %v2497
        %v2585 = vunpack.c.l.b16 %v2498
        %v2586 = vunpack.c.h.b16 %v2498
        %v2587 = vunpack.c.l.b16 %v2499
        %v2588 = vunpack.c.h.b16 %v2499
        %v2589 = vunpack.c.l.b16 %v2500
        %v2590 = vunpack.c.h.b16 %v2500
        %v2591 = vunpack.c.l.b16 %v2501
        %v2592 = vunpack.c.h.b16 %v2501
        %v2593 = vunpack.c.l.b16 %v2502
        %v2594 = vunpack.c.h.b16 %v2502
        %v2595 = vunpack.c.l.b16 %v2503
        %v2596 = vunpack.c.h.b16 %v2503
        %v2597 = vunpack.c.l.b16 %v2504
        %v2598 = vunpack.c.h.b16 %v2504
        %v2599 = vunpack.c.l.b16 %v2505
        %v2600 = vunpack.c.h.b16 %v2505
        %v2601 = vunpack.c.l.b16 %v2506
        %v2602 = vunpack.c.h.b16 %v2506
        %v2603 = vpack.c.b16 %v2541, %v2539
        %v2604 = vpack.c.b16 %v2542, %v2540
        %v2605 = vpack.c.b16 %v2545, %v2543
        %v2606 = vpack.c.b16 %v2546, %v2544
        %v2607 = vpack.c.b16 %v2549, %v2547
        %v2608 = vpack.c.b16 %v2550, %v2548
        %v2609 = vpack.c.b16 %v2553, %v2551
        %v2610 = vpack.c.b16 %v2554, %v2552
        %v2611 = vpack.c.b16 %v2557, %v2555
        %v2612 = vpack.c.b16 %v2558, %v2556
        %v2613 = vpack.c.b16 %v2561, %v2559
        %v2614 = vpack.c.b16 %v2562, %v2560
        %v2615 = vpack.c.b16 %v2565, %v2563
        %v2616 = vpack.c.b16 %v2566, %v2564
        %v2617 = vpack.c.b16 %v2569, %v2567
        %v2618 = vpack.c.b16 %v2570, %v2568
        %v2619 = vpack.c.b16 %v2573, %v2571
        %v2620 = vpack.c.b16 %v2574, %v2572
        %v2621 = vpack.c.b16 %v2577, %v2575
        %v2622 = vpack.c.b16 %v2578, %v2576
        %v2623 = vpack.c.b16 %v2581, %v2579
        %v2624 = vpack.c.b16 %v2582, %v2580
        %v2625 = vpack.c.b16 %v2585, %v2583
        %v2626 = vpack.c.b16 %v2586, %v2584
        %v2627 = vpack.c.b16 %v2589, %v2587
        %v2628 = vpack.c.b16 %v2590, %v2588
        %v2629 = vpack.c.b16 %v2593, %v2591
        %v2630 = vpack.c.b16 %v2594, %v2592
        %v2631 = vpack.c.b16 %v2597, %v2595
        %v2632 = vpack.c.b16 %v2598, %v2596
        %v2633 = vpack.c.b16 %v2601, %v2599
        %v2634 = vpack.c.b16 %v2602, %v2600
        %2667 = vmatprep.subr.bf16.mxu0 %v2618
        %2668 = vmatpush1.bf16.msra.mxu0 %v2617
        %2669 = vmatprep.subr.bf16.mxu0 %v2616
        %2670 = vmatpush1.bf16.msra.mxu0 %v2615
        %2671 = vmatprep.subr.bf16.mxu0 %v2614
        %2672 = vmatpush1.bf16.msra.mxu0 %v2613
        %2673 = vmatprep.subr.bf16.mxu0 %v2612
        %2674 = vmatpush1.bf16.msra.mxu0 %v2611
        %2675 = vmatprep.subr.bf16.mxu0 %v2610
        %2676 = vmatpush1.bf16.msra.mxu0 %v2609
        %2677 = vmatprep.subr.bf16.mxu0 %v2608
        %2678 = vmatpush1.bf16.msra.mxu0 %v2607
        %2679 = vmatprep.subr.bf16.mxu0 %v2606
        %2680 = vmatpush1.bf16.msra.mxu0 %v2605
        %2681 = vmatprep.subr.bf16.mxu0 %v2604
        %2682 = vmatpush1.bf16.msra.mxu0 %v2603
        %2683 = vmatprep.subr.bf16.mxu0 %v2634
        %2684 = vmatpush2.bf16.msra.mxu0 %v2633
        %2685 = vmatprep.subr.bf16.mxu0 %v2632
        %2686 = vmatpush2.bf16.msra.mxu0 %v2631
        %2687 = vmatprep.subr.bf16.mxu0 %v2630
        %2688 = vmatpush2.bf16.msra.mxu0 %v2629
        %2689 = vmatprep.subr.bf16.mxu0 %v2628
        %2690 = vmatpush2.bf16.msra.mxu0 %v2627
        %2691 = vmatprep.subr.bf16.mxu0 %v2626
        %2692 = vmatpush2.bf16.msra.mxu0 %v2625
        %2693 = vmatprep.subr.bf16.mxu0 %v2624
        %2694 = vmatpush2.bf16.msra.mxu0 %v2623
        %2695 = vmatprep.subr.bf16.mxu0 %v2622
        %2696 = vmatpush2.bf16.msra.mxu0 %v2621
        %2697 = vmatprep.subr.bf16.mxu0 %v2620
        %2698 = vmatpush2.bf16.msra.mxu0 %v2619
        %2699 = vmatprep.mubr.bf16.mxu0 %v2460
        %2700 = vmatmul.mubr.bf16.gmra.mxu0 %v2459
        %v2701 = vpop.f32.mrf.mxu0
        %v2702 = vadd.f32 0.0, %v2701
        %v2703 = vpop.f32.mrf.mxu0
        %v2704 = vadd.f32 0.0, %v2703
        %v2705 = vpop.f32.mrf.mxu0
        %v2706 = vadd.f32 0.0, %v2705
        %v2707 = vpop.f32.mrf.mxu0
        %v2708 = vadd.f32 0.0, %v2707
        %2709 = vmatprep.mubr.bf16.mxu0 %v2462
        %2710 = vmatmul.mubr.bf16.gmra.mxu0 %v2461
        %v2711 = vpop.f32.mrf.mxu0
        %v2712 = vadd.f32 0.0, %v2711
        %v2713 = vpop.f32.mrf.mxu0
        %v2714 = vadd.f32 0.0, %v2713
        %v2715 = vpop.f32.mrf.mxu0
        %v2716 = vadd.f32 0.0, %v2715
        %v2717 = vpop.f32.mrf.mxu0
        %v2718 = vadd.f32 0.0, %v2717
        %2719 = vmatprep.mubr.bf16.mxu0 %v2464
        %2720 = vmatmul.mubr.bf16.gmra.mxu0 %v2463
        %v2721 = vpop.f32.mrf.mxu0
        %v2722 = vadd.f32 0.0, %v2721
        %v2723 = vpop.f32.mrf.mxu0
        %v2724 = vadd.f32 0.0, %v2723
        %v2725 = vpop.f32.mrf.mxu0
        %v2726 = vadd.f32 0.0, %v2725
        %v2727 = vpop.f32.mrf.mxu0
        %v2728 = vadd.f32 0.0, %v2727
        %2729 = vmatprep.mubr.bf16.mxu0 %v2466
        %2730 = vmatmul.mubr.bf16.gmra.mxu0 %v2465
        %v2731 = vpop.f32.mrf.mxu0
        %v2732 = vadd.f32 0.0, %v2731
        %v2733 = vpop.f32.mrf.mxu0
        %v2734 = vadd.f32 0.0, %v2733
        %v2735 = vpop.f32.mrf.mxu0
        %v2736 = vadd.f32 0.0, %v2735
        %v2737 = vpop.f32.mrf.mxu0
        %v2738 = vadd.f32 0.0, %v2737
        %2739 = vmatprep.mubr.bf16.mxu0 %v2468
        %2740 = vmatmul.mubr.bf16.gmra.mxu0 %v2467
        %v2741 = vpop.f32.mrf.mxu0
        %v2742 = vadd.f32 0.0, %v2741
        %v2743 = vpop.f32.mrf.mxu0
        %v2744 = vadd.f32 0.0, %v2743
        %v2745 = vpop.f32.mrf.mxu0
        %v2746 = vadd.f32 0.0, %v2745
        %v2747 = vpop.f32.mrf.mxu0
        %v2748 = vadd.f32 0.0, %v2747
        %2749 = vmatprep.mubr.bf16.mxu0 %v2470
        %2750 = vmatmul.mubr.bf16.gmra.mxu0 %v2469
        %v2751 = vpop.f32.mrf.mxu0
        %v2752 = vadd.f32 0.0, %v2751
        %v2753 = vpop.f32.mrf.mxu0
        %v2754 = vadd.f32 0.0, %v2753
        %v2755 = vpop.f32.mrf.mxu0
        %v2756 = vadd.f32 0.0, %v2755
        %v2757 = vpop.f32.mrf.mxu0
        %v2758 = vadd.f32 0.0, %v2757
        %2759 = vmatprep.mubr.bf16.mxu0 %v2472
        %2760 = vmatmul.mubr.bf16.gmra.mxu0 %v2471
        %v2761 = vpop.f32.mrf.mxu0
        %v2762 = vadd.f32 0.0, %v2761
        %v2763 = vpop.f32.mrf.mxu0
        %v2764 = vadd.f32 0.0, %v2763
        %v2765 = vpop.f32.mrf.mxu0
        %v2766 = vadd.f32 0.0, %v2765
        %v2767 = vpop.f32.mrf.mxu0
        %v2768 = vadd.f32 0.0, %v2767
        %2769 = vmatprep.mubr.bf16.mxu0 %v2474
        %2770 = vmatmul.mubr.bf16.gmra.mxu0 %v2473
        %v2771 = vpop.f32.mrf.mxu0
        %v2772 = vadd.f32 0.0, %v2771
        %v2773 = vpop.f32.mrf.mxu0
        %v2774 = vadd.f32 0.0, %v2773
        %v2775 = vpop.f32.mrf.mxu0
        %v2776 = vadd.f32 0.0, %v2775
        %v2777 = vpop.f32.mrf.mxu0
        %v2778 = vadd.f32 0.0, %v2777
        %2779 = vdwg.mxu0
        %p2780 = scmp.eq.s32.totalorder %s23, 0
        // Predicated region
        $region65: #{tpu_custom_call.1} parent=43 // pred_check
          %p2781 = pneg %p2780
        $region66: #{tpu_custom_call.1} parent=43 // pred_check_branch
          %2783 = sbr.rel (%p2781) target = $region68
        $region67: #{tpu_custom_call.1} parent=43 // pred_region
          %2784 = vst [vmem:[#allocation12] sm:$0xff] 0.0
          %2785 = vst [vmem:[#allocation12 + $0x8] sm:$0xff] 0.0
          %2786 = vst [vmem:[#allocation12 + $0x10] sm:$0xff] 0.0
          %2787 = vst [vmem:[#allocation12 + $0x18] sm:$0xff] 0.0
          %2788 = vst [vmem:[#allocation12 + $0x20] sm:$0xff] 0.0
          %2789 = vst [vmem:[#allocation12 + $0x28] sm:$0xff] 0.0
          %2790 = vst [vmem:[#allocation12 + $0x30] sm:$0xff] 0.0
          %2791 = vst [vmem:[#allocation12 + $0x38] sm:$0xff] 0.0
          %2792 = vst [vmem:[#allocation12 + $0x40] sm:$0xff] 0.0
          %2793 = vst [vmem:[#allocation12 + $0x48] sm:$0xff] 0.0
          %2794 = vst [vmem:[#allocation12 + $0x50] sm:$0xff] 0.0
          %2795 = vst [vmem:[#allocation12 + $0x58] sm:$0xff] 0.0
          %2796 = vst [vmem:[#allocation12 + $0x60] sm:$0xff] 0.0
          %2797 = vst [vmem:[#allocation12 + $0x68] sm:$0xff] 0.0
          %2798 = vst [vmem:[#allocation12 + $0x70] sm:$0xff] 0.0
          %2799 = vst [vmem:[#allocation12 + $0x78] sm:$0xff] 0.0
          %2800 = vst [vmem:[#allocation12 + $0x80] sm:$0xff] 0.0
          %2801 = vst [vmem:[#allocation12 + $0x88] sm:$0xff] 0.0
          %2802 = vst [vmem:[#allocation12 + $0x90] sm:$0xff] 0.0
          %2803 = vst [vmem:[#allocation12 + $0x98] sm:$0xff] 0.0
          %2804 = vst [vmem:[#allocation12 + $0xa0] sm:$0xff] 0.0
          %2805 = vst [vmem:[#allocation12 + $0xa8] sm:$0xff] 0.0
          %2806 = vst [vmem:[#allocation12 + $0xb0] sm:$0xff] 0.0
          %2807 = vst [vmem:[#allocation12 + $0xb8] sm:$0xff] 0.0
          %2808 = vst [vmem:[#allocation12 + $0xc0] sm:$0xff] 0.0
          %2809 = vst [vmem:[#allocation12 + $0xc8] sm:$0xff] 0.0
          %2810 = vst [vmem:[#allocation12 + $0xd0] sm:$0xff] 0.0
          %2811 = vst [vmem:[#allocation12 + $0xd8] sm:$0xff] 0.0
          %2812 = vst [vmem:[#allocation12 + $0xe0] sm:$0xff] 0.0
          %2813 = vst [vmem:[#allocation12 + $0xe8] sm:$0xff] 0.0
          %2814 = vst [vmem:[#allocation12 + $0xf0] sm:$0xff] 0.0
          %2815 = vst [vmem:[#allocation12 + $0xf8] sm:$0xff] 0.0
        $region68: #{tpu_custom_call.1} parent=43 // pred_fallthru
          _
        %v2816 = vld [vmem:[#allocation12] sm:$0xff]
        %v2817 = vld [vmem:[#allocation12 + $0x8] sm:$0xff]
        %v2818 = vld [vmem:[#allocation12 + $0x10] sm:$0xff]
        %v2819 = vld [vmem:[#allocation12 + $0x18] sm:$0xff]
        %v2820 = vld [vmem:[#allocation12 + $0x20] sm:$0xff]
        %v2821 = vld [vmem:[#allocation12 + $0x28] sm:$0xff]
        %v2822 = vld [vmem:[#allocation12 + $0x30] sm:$0xff]
        %v2823 = vld [vmem:[#allocation12 + $0x38] sm:$0xff]
        %v2824 = vld [vmem:[#allocation12 + $0x40] sm:$0xff]
        %v2825 = vld [vmem:[#allocation12 + $0x48] sm:$0xff]
        %v2826 = vld [vmem:[#allocation12 + $0x50] sm:$0xff]
        %v2827 = vld [vmem:[#allocation12 + $0x58] sm:$0xff]
        %v2828 = vld [vmem:[#allocation12 + $0x60] sm:$0xff]
        %v2829 = vld [vmem:[#allocation12 + $0x68] sm:$0xff]
        %v2830 = vld [vmem:[#allocation12 + $0x70] sm:$0xff]
        %v2831 = vld [vmem:[#allocation12 + $0x78] sm:$0xff]
        %v2832 = vld [vmem:[#allocation12 + $0x80] sm:$0xff]
        %v2833 = vld [vmem:[#allocation12 + $0x88] sm:$0xff]
        %v2834 = vld [vmem:[#allocation12 + $0x90] sm:$0xff]
        %v2835 = vld [vmem:[#allocation12 + $0x98] sm:$0xff]
        %v2836 = vld [vmem:[#allocation12 + $0xa0] sm:$0xff]
        %v2837 = vld [vmem:[#allocation12 + $0xa8] sm:$0xff]
        %v2838 = vld [vmem:[#allocation12 + $0xb0] sm:$0xff]
        %v2839 = vld [vmem:[#allocation12 + $0xb8] sm:$0xff]
        %v2840 = vld [vmem:[#allocation12 + $0xc0] sm:$0xff]
        %v2841 = vld [vmem:[#allocation12 + $0xc8] sm:$0xff]
        %v2842 = vld [vmem:[#allocation12 + $0xd0] sm:$0xff]
        %v2843 = vld [vmem:[#allocation12 + $0xd8] sm:$0xff]
        %v2844 = vld [vmem:[#allocation12 + $0xe0] sm:$0xff]
        %v2845 = vld [vmem:[#allocation12 + $0xe8] sm:$0xff]
        %v2846 = vld [vmem:[#allocation12 + $0xf0] sm:$0xff]
        %v2847 = vld [vmem:[#allocation12 + $0xf8] sm:$0xff]
        %v2848 = vadd.f32 %v2816, %v2702
        %v2849 = vadd.f32 %v2817, %v2704
        %v2850 = vadd.f32 %v2818, %v2706
        %v2851 = vadd.f32 %v2819, %v2708
        %v2852 = vadd.f32 %v2820, %v2712
        %v2853 = vadd.f32 %v2821, %v2714
        %v2854 = vadd.f32 %v2822, %v2716
        %v2855 = vadd.f32 %v2823, %v2718
        %v2856 = vadd.f32 %v2824, %v2722
        %v2857 = vadd.f32 %v2825, %v2724
        %v2858 = vadd.f32 %v2826, %v2726
        %v2859 = vadd.f32 %v2827, %v2728
        %v2860 = vadd.f32 %v2828, %v2732
        %v2861 = vadd.f32 %v2829, %v2734
        %v2862 = vadd.f32 %v2830, %v2736
        %v2863 = vadd.f32 %v2831, %v2738
        %v2864 = vadd.f32 %v2832, %v2742
        %v2865 = vadd.f32 %v2833, %v2744
        %v2866 = vadd.f32 %v2834, %v2746
        %v2867 = vadd.f32 %v2835, %v2748
        %v2868 = vadd.f32 %v2836, %v2752
        %v2869 = vadd.f32 %v2837, %v2754
        %v2870 = vadd.f32 %v2838, %v2756
        %v2871 = vadd.f32 %v2839, %v2758
        %v2872 = vadd.f32 %v2840, %v2762
        %v2873 = vadd.f32 %v2841, %v2764
        %v2874 = vadd.f32 %v2842, %v2766
        %v2875 = vadd.f32 %v2843, %v2768
        %v2876 = vadd.f32 %v2844, %v2772
        %v2877 = vadd.f32 %v2845, %v2774
        %v2878 = vadd.f32 %v2846, %v2776
        %v2879 = vadd.f32 %v2847, %v2778
        %2880 = vst [vmem:[#allocation12] sm:$0xff] %v2848
        %2881 = vst [vmem:[#allocation12 + $0x8] sm:$0xff] %v2849
        %2882 = vst [vmem:[#allocation12 + $0x10] sm:$0xff] %v2850
        %2883 = vst [vmem:[#allocation12 + $0x18] sm:$0xff] %v2851
        %2884 = vst [vmem:[#allocation12 + $0x20] sm:$0xff] %v2852
        %2885 = vst [vmem:[#allocation12 + $0x28] sm:$0xff] %v2853
        %2886 = vst [vmem:[#allocation12 + $0x30] sm:$0xff] %v2854
        %2887 = vst [vmem:[#allocation12 + $0x38] sm:$0xff] %v2855
        %2888 = vst [vmem:[#allocation12 + $0x40] sm:$0xff] %v2856
        %2889 = vst [vmem:[#allocation12 + $0x48] sm:$0xff] %v2857
        %2890 = vst [vmem:[#allocation12 + $0x50] sm:$0xff] %v2858
        %2891 = vst [vmem:[#allocation12 + $0x58] sm:$0xff] %v2859
        %2892 = vst [vmem:[#allocation12 + $0x60] sm:$0xff] %v2860
        %2893 = vst [vmem:[#allocation12 + $0x68] sm:$0xff] %v2861
        %2894 = vst [vmem:[#allocation12 + $0x70] sm:$0xff] %v2862
        %2895 = vst [vmem:[#allocation12 + $0x78] sm:$0xff] %v2863
        %2896 = vst [vmem:[#allocation12 + $0x80] sm:$0xff] %v2864
        %2897 = vst [vmem:[#allocation12 + $0x88] sm:$0xff] %v2865
        %2898 = vst [vmem:[#allocation12 + $0x90] sm:$0xff] %v2866
        %2899 = vst [vmem:[#allocation12 + $0x98] sm:$0xff] %v2867
        %2900 = vst [vmem:[#allocation12 + $0xa0] sm:$0xff] %v2868
        %2901 = vst [vmem:[#allocation12 + $0xa8] sm:$0xff] %v2869
        %2902 = vst [vmem:[#allocation12 + $0xb0] sm:$0xff] %v2870
        %2903 = vst [vmem:[#allocation12 + $0xb8] sm:$0xff] %v2871
        %2904 = vst [vmem:[#allocation12 + $0xc0] sm:$0xff] %v2872
        %2905 = vst [vmem:[#allocation12 + $0xc8] sm:$0xff] %v2873
        %2906 = vst [vmem:[#allocation12 + $0xd0] sm:$0xff] %v2874
        %2907 = vst [vmem:[#allocation12 + $0xd8] sm:$0xff] %v2875
        %2908 = vst [vmem:[#allocation12 + $0xe0] sm:$0xff] %v2876
        %2909 = vst [vmem:[#allocation12 + $0xe8] sm:$0xff] %v2877
        %2910 = vst [vmem:[#allocation12 + $0xf0] sm:$0xff] %v2878
        %2911 = vst [vmem:[#allocation12 + $0xf8] sm:$0xff] %v2879
        // Predicated region
        $region69: #{tpu_custom_call.1} parent=43 // pred_check
          %p2912 = pneg %p172
        $region70: #{tpu_custom_call.1} parent=43 // pred_check_branch
          %2914 = sbr.rel (%p2912) target = $region72
        $region71: #{tpu_custom_call.1} parent=43 // pred_region
          %s2916 = ssub.s32 4096, 4096
          %2917 = vsyncadd [#allocation5], %s2916
          %s2918 = sshll.u32 [#allocation12], 4
          %s2919 = int_to_ptr.vmem [resolvable:$true] %s2918
          %2924 = dma.vmem_to_hbm [thread:$0]  %s2919, 4096, %s6, [#allocation5], 256, 256, 16
        $region72: #{tpu_custom_call.1} parent=43 // pred_fallthru
          _
        // Predicated region
        $region73: #{tpu_custom_call.1} parent=43 // pred_check
          %p2925 = pneg %p172
        $region74: #{tpu_custom_call.1} parent=43 // pred_check_branch
          %2927 = sbr.rel (%p2925) target = $region76
        $region75: #{tpu_custom_call.1} parent=43 // pred_region
          %2928 = dma.done [#allocation5], 4096
        $region76: #{tpu_custom_call.1} parent=43 // pred_fallthru
          _
      $region44: #{tpu_custom_call.1} parent=5 // pred_fallthru
        _
      %p2929 = scmp.le.s32.totalorder 2, %s18
      // Predicated region
      $region77: #{tpu_custom_call.1} parent=5 // pred_check
        %p2930 = pneg %p2929
      $region78: #{tpu_custom_call.1} parent=5 // pred_check_branch
        %2932 = sbr.rel (%p2930) target = $region80
      $region79: #{tpu_custom_call.1} parent=5 // pred_region
        %s2933 = ssub.s32 %s18, 2
      $region80: #{tpu_custom_call.1} parent=5 // pred_fallthru
        _
    $region6: #{tpu_custom_call.1} parent=1 // loop_footer
      %s22 = sadd.s32 1, %s18
    $region7: #{tpu_custom_call.1} parent=1 // loop_footer_branch
      %17 = sbr.rel target = $region3
    $region8: #{tpu_custom_call.1} parent=1 // loop_exit
      _
    %2934 = vsyncpa [#allocation4], 1
    %s2935 = scalar_lea.sflag [#allocation4], 1
    %2936 = vsyncpa %s2935, 1
    %2937 = vsyncpa [#allocation7], 1
    %s2938 = scalar_lea.sflag [#allocation7], 1
    %2939 = vsyncpa %s2938, 1
    %2940 = vsyncpa [#allocation10], 1
    %2941 = vsyncpa [#allocation5], 1
    %s2942 = scalar_lea.sflag [#allocation5], 1
    %2943 = vsyncpa %s2942, 1

</llo_original>
